<compile_context>
chip_gen: v5e
topology: v5e:2x2
jax: 0.10.0
libtpu: 0.0.40
codegen_flags: <defaults>
</compile_context>

<pallas_src>
import jax
import jax.numpy as jnp
from jax.experimental import pallas as pl
from jax.experimental.pallas import tpu as pltpu

EPS = 1e-5


def conv_bn_relu_kernel(w_ref, x_ref, gamma_ref, beta_ref, o_ref):
    # w_ref:     [Cout, Cin]  bf16
    # x_ref:     [Cin, P]     bf16
    # gamma/beta:[Cout, 1]    f32
    # o_ref:     [Cout, P]    f32
    # 1x1 conv == channel matmul on the MXU, f32 accumulation.
    y = jnp.dot(w_ref[...], x_ref[...],
                preferred_element_type=jnp.float32)            # [Cout, P]

    # BatchNorm2d (training mode): per-channel (per-row) batch stats over P,
    # biased variance, single reduction pass (sum + sum of squares).
    p = y.shape[-1]
    inv_p = 1.0 / p
    s = jnp.sum(y, axis=-1, keepdims=True)                     # [Cout, 1]
    sq = jnp.sum(y * y, axis=-1, keepdims=True)                # [Cout, 1]
    mean = s * inv_p
    var = jnp.maximum(sq * inv_p - mean * mean, 0.0)
    inv_std = jax.lax.rsqrt(var + EPS)

    # Fold affine: out = y * a + b, then ReLU.
    a = gamma_ref[...] * inv_std                               # [Cout, 1]
    b = beta_ref[...] - mean * a                               # [Cout, 1]
    o_ref[...] = jnp.maximum(y * a + b, 0.0)


def conv_bn_relu(x_nchw, w_oihw, gamma, beta):
    N, Cin, H, W = x_nchw.shape
    Cout = w_oihw.shape[0]
    P = N * H * W

    if N == 1:
        # Free reshape: NCHW with N=1 is already channels-major over spatial.
        x_cp = x_nchw.reshape(Cin, P)
    else:
        # General case needs a real transpose (not hit by this module, N==1).
        x_cp = jnp.transpose(x_nchw, (1, 0, 2, 3)).reshape(Cin, P)

    w_mat = w_oihw.reshape(Cout, Cin)                          # free reshape
    gamma2 = gamma.reshape(Cout, 1).astype(jnp.float32)
    beta2 = beta.reshape(Cout, 1).astype(jnp.float32)

    out_cp = pl.pallas_call(
        conv_bn_relu_kernel,
        out_shape=jax.ShapeDtypeStruct((Cout, P), jnp.float32),
        in_specs=[
            pl.BlockSpec(memory_space=pltpu.MemorySpace.VMEM),
            pl.BlockSpec(memory_space=pltpu.MemorySpace.VMEM),
            pl.BlockSpec(memory_space=pltpu.MemorySpace.VMEM),
            pl.BlockSpec(memory_space=pltpu.MemorySpace.VMEM),
        ],
        out_specs=pl.BlockSpec(memory_space=pltpu.MemorySpace.VMEM),
    )(w_mat.astype(jnp.bfloat16), x_cp.astype(jnp.bfloat16), gamma2, beta2)

    if N == 1:
        return out_cp.reshape(1, Cout, H, W)                   # free reshape
    return jnp.transpose(out_cp.reshape(Cout, N, H, W), (1, 0, 2, 3))


def reference(x_nchw, w_oihw, gamma, beta):
    # Pure-JAX f32 reference matching PyTorch semantics.
    N, Cin, H, W = x_nchw.shape
    Cout = w_oihw.shape[0]
    x_mat = jnp.transpose(x_nchw, (0, 2, 3, 1)).reshape(-1, Cin)
    w_mat = w_oihw.reshape(Cout, Cin).T
    y = x_mat @ w_mat
    mean = y.mean(axis=0, keepdims=True)
    var = ((y - mean) ** 2).mean(axis=0, keepdims=True)
    out = (y - mean) / jnp.sqrt(var + EPS) * gamma[None, :] + beta[None, :]
    out = jnp.maximum(out, 0.0)
    return jnp.transpose(out.reshape(N, H, W, Cout), (0, 3, 1, 2))


if __name__ == "__main__":
    key = jax.random.PRNGKey(0)
    kx, kw = jax.random.split(key, 2)

    # Shapes implied by the module's forward: x498 = randn([1, 960, 7, 7])
    x = jax.random.normal(kx, (1, 960, 7, 7), dtype=jnp.float32)
    w = jax.random.normal(kw, (128, 960, 1, 1), dtype=jnp.float32) * 0.02
    gamma = jnp.ones((128,), dtype=jnp.float32)   # PyTorch BN default init
    beta = jnp.zeros((128,), dtype=jnp.float32)

    out = conv_bn_relu(x, w, gamma, beta)
    out = jax.block_until_ready(out)

    ref = reference(x, w, gamma, beta)
    assert out.shape == (1, 128, 7, 7)
    # Tolerance loosened vs. pure-f32 because matmul inputs are quantized to
    # bf16 (accumulation and all BN math remain f32).
    assert jnp.allclose(out, ref, atol=2e-2, rtol=2e-2)
    print("KERNEL_OK")
</pallas_src>

<mosaic_0001>
module attributes {stable_mosaic.version = 11 : i64} {
  func.func @conv_bn_relu_kernel(%arg0: memref<128x960xbf16, #tpu.memory_space<vmem>>, %arg1: memref<960x49xbf16, #tpu.memory_space<vmem>>, %arg2: memref<128x1xf32, #tpu.memory_space<vmem>>, %arg3: memref<128x1xf32, #tpu.memory_space<vmem>>, %arg4: memref<128x49xf32, #tpu.memory_space<vmem>>) attributes {dimension_semantics = [], scalar_prefetch = 0 : i64, scratch_operands = 0 : i64, tpu.core_type = #tpu.core_type<tc>} {
    %c0 = arith.constant 0 : index
    %c0_0 = arith.constant 0 : index
    %0 = vector.load %arg0[%c0, %c0_0] : memref<128x960xbf16, #tpu.memory_space<vmem>>, vector<128x960xbf16>
    %c0_1 = arith.constant 0 : index
    %c0_2 = arith.constant 0 : index
    %1 = vector.load %arg1[%c0_1, %c0_2] : memref<960x49xbf16, #tpu.memory_space<vmem>>, vector<960x49xbf16>
    %cst = arith.constant dense<0.000000e+00> : vector<128x49xf32>
    %2 = tpu.matmul %0, %1, %cst {dimension_numbers = #tpu.dot_dimension_numbers<[1], [0], [0], [1], [0, 0, 1, 1], [], []>} : vector<128x960xbf16>, vector<960x49xbf16>, vector<128x49xf32> -> vector<128x49xf32>
    %cst_3 = arith.constant dense<0.000000e+00> : vector<128xf32>
    %3 = vector.multi_reduction <add>, %2, %cst_3 [1] : vector<128x49xf32> to vector<128xf32>
    %4 = vector.shape_cast %3 : vector<128xf32> to vector<128x1xf32>
    %5 = arith.mulf %2, %2 : vector<128x49xf32>
    %cst_4 = arith.constant dense<0.000000e+00> : vector<128xf32>
    %6 = vector.multi_reduction <add>, %5, %cst_4 [1] : vector<128x49xf32> to vector<128xf32>
    %7 = vector.shape_cast %6 : vector<128xf32> to vector<128x1xf32>
    %cst_5 = arith.constant 0.0204081628 : f32
    %8 = vector.broadcast %cst_5 : f32 to vector<128x1xf32>
    %9 = arith.mulf %4, %8 : vector<128x1xf32>
    %cst_6 = arith.constant 0.0204081628 : f32
    %10 = vector.broadcast %cst_6 : f32 to vector<128x1xf32>
    %11 = arith.mulf %7, %10 : vector<128x1xf32>
    %12 = arith.mulf %9, %9 : vector<128x1xf32>
    %13 = arith.subf %11, %12 : vector<128x1xf32>
    %cst_7 = arith.constant 0.000000e+00 : f32
    %14 = vector.broadcast %cst_7 : f32 to vector<128x1xf32>
    %15 = arith.maximumf %13, %14 : vector<128x1xf32>
    %cst_8 = arith.constant 9.99999974E-6 : f32
    %16 = vector.broadcast %cst_8 : f32 to vector<128x1xf32>
    %17 = arith.addf %15, %16 : vector<128x1xf32>
    %18 = math.rsqrt %17 : vector<128x1xf32>
    %c0_9 = arith.constant 0 : index
    %c0_10 = arith.constant 0 : index
    %19 = vector.load %arg2[%c0_9, %c0_10] : memref<128x1xf32, #tpu.memory_space<vmem>>, vector<128x1xf32>
    %20 = arith.mulf %19, %18 : vector<128x1xf32>
    %c0_11 = arith.constant 0 : index
    %c0_12 = arith.constant 0 : index
    %21 = vector.load %arg3[%c0_11, %c0_12] : memref<128x1xf32, #tpu.memory_space<vmem>>, vector<128x1xf32>
    %22 = arith.mulf %9, %20 : vector<128x1xf32>
    %23 = arith.subf %21, %22 : vector<128x1xf32>
    %24 = vector.broadcast %20 : vector<128x1xf32> to vector<128x49xf32>
    %25 = arith.mulf %2, %24 : vector<128x49xf32>
    %26 = vector.broadcast %23 : vector<128x1xf32> to vector<128x49xf32>
    %27 = arith.addf %25, %26 : vector<128x49xf32>
    %cst_13 = arith.constant 0.000000e+00 : f32
    %28 = vector.broadcast %cst_13 : f32 to vector<128x49xf32>
    %29 = arith.maximumf %27, %28 : vector<128x49xf32>
    %c0_14 = arith.constant 0 : index
    %c0_15 = arith.constant 0 : index
    %30 = vector.load %arg4[%c0_14, %c0_15] : memref<128x49xf32, #tpu.memory_space<vmem>>, vector<128x49xf32>
    tpu.vector_store %arg4[%c0_14, %c0_15], %29 {strides = array<i32>} : memref<128x49xf32, #tpu.memory_space<vmem>>, vector<128x49xf32>,
    return
  }
}

</mosaic_0001>

<llo_original>
// kernel: tpu_custom_call.1
$region0: #{tpu_custom_call.1}
  #allocation0 [shape = 'u32[]', space=smem, size = 0x4, offset = 0x4, fixed_abs, tag = 'smem constant byte address 0x4 - core index']
  #allocation1 [shape = 'u32[72,128]{1,0:T(1,128)}', space=vmem, size = 0x9000, scoped, tag = 'internal scratch']
  %s0 = inlined_call_operand.vmem [shape: bf16[128,960], index: 0, kind: input, shape index: {}]
  %s1 = inlined_call_operand.vmem [shape: bf16[960,49], index: 1, kind: input, shape index: {}]
  %s2 = inlined_call_operand.vmem [shape: f32[128,1], index: 2, kind: input, shape index: {}]
  %s3 = inlined_call_operand.vmem [shape: f32[128,1], index: 3, kind: input, shape index: {}]
  %s4 = inlined_call_operand.vmem [shape: f32[128,49], index: 4, kind: output, shape index: {}]
  %s5 = sld [smem:[#allocation0]]
  $region26: #{tpu_custom_call.1} parent=0
    _
  %s7 = ssub.s32 1, %s5
  %s8 = scalar_select 0, %s7, %s5
  // Predicated region
  $region2: #{tpu_custom_call.1} parent=0 // pred_check
    _
  $region3: #{tpu_custom_call.1} parent=0 // pred_check_branch
    %10 = sbr.rel (0) target = $region5
  $region4: #{tpu_custom_call.1} parent=0 // pred_region
    _
  $region5: #{tpu_custom_call.1} parent=0 // pred_fallthru
    _
  // Predicated region
  $region6: #{tpu_custom_call.1} parent=0 // pred_check
    _
  $region7: #{tpu_custom_call.1} parent=0 // pred_check_branch
    %12 = sbr.rel (0) target = $region9
  $region8: #{tpu_custom_call.1} parent=0 // pred_region
    _
  $region9: #{tpu_custom_call.1} parent=0 // pred_fallthru
    _
  // Predicated region
  $region10: #{tpu_custom_call.1} parent=0 // pred_check
    _
  $region11: #{tpu_custom_call.1} parent=0 // pred_check_branch
    %14 = sbr.rel (0) target = $region13
  $region12: #{tpu_custom_call.1} parent=0 // pred_region
    _
  $region13: #{tpu_custom_call.1} parent=0 // pred_fallthru
    _
  // Predicated region
  $region14: #{tpu_custom_call.1} parent=0 // pred_check
    _
  $region15: #{tpu_custom_call.1} parent=0 // pred_check_branch
    %16 = sbr.rel (0) target = $region17
  $region16: #{tpu_custom_call.1} parent=0 // pred_region
    _
  $region17: #{tpu_custom_call.1} parent=0 // pred_fallthru
    _
  %v18 = vld [vmem:[%s0] sm:$0xff]
  %v19 = vld [vmem:[%s0 + $0x8] sm:$0xff]
  %v20 = vld [vmem:[%s0 + $0x10] sm:$0xff]
  %v21 = vld [vmem:[%s0 + $0x18] sm:$0xff]
  %v22 = vld [vmem:[%s0 + $0x20] sm:$0xff]
  %v23 = vld [vmem:[%s0 + $0x28] sm:$0xff]
  %v24 = vld [vmem:[%s0 + $0x30] sm:$0xff]
  %v25 = vld [vmem:[%s0 + $0x38] sm:$0xff]
  %v26 = vld [vmem:[%s0 + $0x40] sm:$0xff]
  %v27 = vld [vmem:[%s0 + $0x48] sm:$0xff]
  %v28 = vld [vmem:[%s0 + $0x50] sm:$0xff]
  %v29 = vld [vmem:[%s0 + $0x58] sm:$0xff]
  %v30 = vld [vmem:[%s0 + $0x60] sm:$0xff]
  %v31 = vld [vmem:[%s0 + $0x68] sm:$0xff]
  %v32 = vld [vmem:[%s0 + $0x70] sm:$0xff]
  %v33 = vld [vmem:[%s0 + $0x78] sm:$0xff]
  %v34 = vld [vmem:[%s0 + $0x80] sm:$0xff]
  %v35 = vld [vmem:[%s0 + $0x88] sm:$0xff]
  %v36 = vld [vmem:[%s0 + $0x90] sm:$0xff]
  %v37 = vld [vmem:[%s0 + $0x98] sm:$0xff]
  %v38 = vld [vmem:[%s0 + $0xa0] sm:$0xff]
  %v39 = vld [vmem:[%s0 + $0xa8] sm:$0xff]
  %v40 = vld [vmem:[%s0 + $0xb0] sm:$0xff]
  %v41 = vld [vmem:[%s0 + $0xb8] sm:$0xff]
  %v42 = vld [vmem:[%s0 + $0xc0] sm:$0xff]
  %v43 = vld [vmem:[%s0 + $0xc8] sm:$0xff]
  %v44 = vld [vmem:[%s0 + $0xd0] sm:$0xff]
  %v45 = vld [vmem:[%s0 + $0xd8] sm:$0xff]
  %v46 = vld [vmem:[%s0 + $0xe0] sm:$0xff]
  %v47 = vld [vmem:[%s0 + $0xe8] sm:$0xff]
  %v48 = vld [vmem:[%s0 + $0xf0] sm:$0xff]
  %v49 = vld [vmem:[%s0 + $0xf8] sm:$0xff]
  %v50 = vld [vmem:[%s0 + $0x100] sm:$0xff]
  %v51 = vld [vmem:[%s0 + $0x108] sm:$0xff]
  %v52 = vld [vmem:[%s0 + $0x110] sm:$0xff]
  %v53 = vld [vmem:[%s0 + $0x118] sm:$0xff]
  %v54 = vld [vmem:[%s0 + $0x120] sm:$0xff]
  %v55 = vld [vmem:[%s0 + $0x128] sm:$0xff]
  %v56 = vld [vmem:[%s0 + $0x130] sm:$0xff]
  %v57 = vld [vmem:[%s0 + $0x138] sm:$0xff]
  %v58 = vld [vmem:[%s0 + $0x140] sm:$0xff]
  %v59 = vld [vmem:[%s0 + $0x148] sm:$0xff]
  %v60 = vld [vmem:[%s0 + $0x150] sm:$0xff]
  %v61 = vld [vmem:[%s0 + $0x158] sm:$0xff]
  %v62 = vld [vmem:[%s0 + $0x160] sm:$0xff]
  %v63 = vld [vmem:[%s0 + $0x168] sm:$0xff]
  %v64 = vld [vmem:[%s0 + $0x170] sm:$0xff]
  %v65 = vld [vmem:[%s0 + $0x178] sm:$0xff]
  %v66 = vld [vmem:[%s0 + $0x180] sm:$0xff]
  %v67 = vld [vmem:[%s0 + $0x188] sm:$0xff]
  %v68 = vld [vmem:[%s0 + $0x190] sm:$0xff]
  %v69 = vld [vmem:[%s0 + $0x198] sm:$0xff]
  %v70 = vld [vmem:[%s0 + $0x1a0] sm:$0xff]
  %v71 = vld [vmem:[%s0 + $0x1a8] sm:$0xff]
  %v72 = vld [vmem:[%s0 + $0x1b0] sm:$0xff]
  %v73 = vld [vmem:[%s0 + $0x1b8] sm:$0xff]
  %v74 = vld [vmem:[%s0 + $0x1c0] sm:$0xff]
  %v75 = vld [vmem:[%s0 + $0x1c8] sm:$0xff]
  %v76 = vld [vmem:[%s0 + $0x1d0] sm:$0xff]
  %v77 = vld [vmem:[%s0 + $0x1d8] sm:$0xff]
  %v78 = vld [vmem:[%s0 + $0x1e0] sm:$0xff]
  %v79 = vld [vmem:[%s0 + $0x1e8] sm:$0xff]
  %v80 = vld [vmem:[%s0 + $0x1f0] sm:$0xff]
  %v81 = vld [vmem:[%s0 + $0x1f8] sm:$0xff]
  %v82 = vld [vmem:[%s1] sm:$0xf]
  %v83 = vld [vmem:[%s1 + $0x4] sm:$0xf]
  %v84 = vld [vmem:[%s1 + $0x8] sm:$0xf]
  %v85 = vld [vmem:[%s1 + $0xc] sm:$0xf]
  %v86 = vld [vmem:[%s1 + $0x10] sm:$0xf]
  %v87 = vld [vmem:[%s1 + $0x14] sm:$0xf]
  %v88 = vld [vmem:[%s1 + $0x18] sm:$0xf]
  %v89 = vld [vmem:[%s1 + $0x1c] sm:$0xf]
  %v90 = vld [vmem:[%s1 + $0x20] sm:$0xf]
  %v91 = vld [vmem:[%s1 + $0x24] sm:$0xf]
  %v92 = vld [vmem:[%s1 + $0x28] sm:$0xf]
  %v93 = vld [vmem:[%s1 + $0x2c] sm:$0xf]
  %v94 = vld [vmem:[%s1 + $0x30] sm:$0xf]
  %v95 = vld [vmem:[%s1 + $0x34] sm:$0xf]
  %v96 = vld [vmem:[%s1 + $0x38] sm:$0xf]
  %v97 = vld [vmem:[%s1 + $0x3c] sm:$0xf]
  %v98 = vld [vmem:[%s1 + $0x40] sm:$0xf]
  %v99 = vld [vmem:[%s1 + $0x44] sm:$0xf]
  %v100 = vld [vmem:[%s1 + $0x48] sm:$0xf]
  %v101 = vld [vmem:[%s1 + $0x4c] sm:$0xf]
  %v102 = vld [vmem:[%s1 + $0x50] sm:$0xf]
  %v103 = vld [vmem:[%s1 + $0x54] sm:$0xf]
  %v104 = vld [vmem:[%s1 + $0x58] sm:$0xf]
  %v105 = vld [vmem:[%s1 + $0x5c] sm:$0xf]
  %v106 = vld [vmem:[%s1 + $0x60] sm:$0xf]
  %v107 = vld [vmem:[%s1 + $0x64] sm:$0xf]
  %v108 = vld [vmem:[%s1 + $0x68] sm:$0xf]
  %v109 = vld [vmem:[%s1 + $0x6c] sm:$0xf]
  %v110 = vld [vmem:[%s1 + $0x70] sm:$0xf]
  %v111 = vld [vmem:[%s1 + $0x74] sm:$0xf]
  %v112 = vld [vmem:[%s1 + $0x78] sm:$0xf]
  %v113 = vld [vmem:[%s1 + $0x7c] sm:$0xf]
  %v114 = vld [vmem:[%s1 + $0x80] sm:$0xf]
  %v115 = vld [vmem:[%s1 + $0x84] sm:$0xf]
  %v116 = vld [vmem:[%s1 + $0x88] sm:$0xf]
  %v117 = vld [vmem:[%s1 + $0x8c] sm:$0xf]
  %v118 = vld [vmem:[%s1 + $0x90] sm:$0xf]
  %v119 = vld [vmem:[%s1 + $0x94] sm:$0xf]
  %v120 = vld [vmem:[%s1 + $0x98] sm:$0xf]
  %v121 = vld [vmem:[%s1 + $0x9c] sm:$0xf]
  %v122 = vld [vmem:[%s1 + $0xa0] sm:$0xf]
  %v123 = vld [vmem:[%s1 + $0xa4] sm:$0xf]
  %v124 = vld [vmem:[%s1 + $0xa8] sm:$0xf]
  %v125 = vld [vmem:[%s1 + $0xac] sm:$0xf]
  %v126 = vld [vmem:[%s1 + $0xb0] sm:$0xf]
  %v127 = vld [vmem:[%s1 + $0xb4] sm:$0xf]
  %v128 = vld [vmem:[%s1 + $0xb8] sm:$0xf]
  %v129 = vld [vmem:[%s1 + $0xbc] sm:$0xf]
  %v130 = vld [vmem:[%s1 + $0xc0] sm:$0xf]
  %v131 = vld [vmem:[%s1 + $0xc4] sm:$0xf]
  %v132 = vld [vmem:[%s1 + $0xc8] sm:$0xf]
  %v133 = vld [vmem:[%s1 + $0xcc] sm:$0xf]
  %v134 = vld [vmem:[%s1 + $0xd0] sm:$0xf]
  %v135 = vld [vmem:[%s1 + $0xd4] sm:$0xf]
  %v136 = vld [vmem:[%s1 + $0xd8] sm:$0xf]
  %v137 = vld [vmem:[%s1 + $0xdc] sm:$0xf]
  %v138 = vld [vmem:[%s1 + $0xe0] sm:$0xf]
  %v139 = vld [vmem:[%s1 + $0xe4] sm:$0xf]
  %v140 = vld [vmem:[%s1 + $0xe8] sm:$0xf]
  %v141 = vld [vmem:[%s1 + $0xec] sm:$0xf]
  %v142 = vld [vmem:[%s1 + $0xf0] sm:$0xf]
  %v143 = vld [vmem:[%s1 + $0xf4] sm:$0xf]
  %v144 = vld [vmem:[%s1 + $0xf8] sm:$0xf]
  %v145 = vld [vmem:[%s1 + $0xfc] sm:$0xf]
  %v146 = vld [vmem:[%s1 + $0x100] sm:$0xf]
  %v147 = vld [vmem:[%s1 + $0x104] sm:$0xf]
  %v148 = vld [vmem:[%s1 + $0x108] sm:$0xf]
  %v149 = vld [vmem:[%s1 + $0x10c] sm:$0xf]
  %v150 = vld [vmem:[%s1 + $0x110] sm:$0xf]
  %v151 = vld [vmem:[%s1 + $0x114] sm:$0xf]
  %v152 = vld [vmem:[%s1 + $0x118] sm:$0xf]
  %v153 = vld [vmem:[%s1 + $0x11c] sm:$0xf]
  %v154 = vld [vmem:[%s1 + $0x120] sm:$0xf]
  %v155 = vld [vmem:[%s1 + $0x124] sm:$0xf]
  %v156 = vld [vmem:[%s1 + $0x128] sm:$0xf]
  %v157 = vld [vmem:[%s1 + $0x12c] sm:$0xf]
  %v158 = vld [vmem:[%s1 + $0x130] sm:$0xf]
  %v159 = vld [vmem:[%s1 + $0x134] sm:$0xf]
  %v160 = vld [vmem:[%s1 + $0x138] sm:$0xf]
  %v161 = vld [vmem:[%s1 + $0x13c] sm:$0xf]
  %v162 = vld [vmem:[%s1 + $0x140] sm:$0xf]
  %v163 = vld [vmem:[%s1 + $0x144] sm:$0xf]
  %v164 = vld [vmem:[%s1 + $0x148] sm:$0xf]
  %v165 = vld [vmem:[%s1 + $0x14c] sm:$0xf]
  %v166 = vld [vmem:[%s1 + $0x150] sm:$0xf]
  %v167 = vld [vmem:[%s1 + $0x154] sm:$0xf]
  %v168 = vld [vmem:[%s1 + $0x158] sm:$0xf]
  %v169 = vld [vmem:[%s1 + $0x15c] sm:$0xf]
  %v170 = vld [vmem:[%s1 + $0x160] sm:$0xf]
  %v171 = vld [vmem:[%s1 + $0x164] sm:$0xf]
  %v172 = vld [vmem:[%s1 + $0x168] sm:$0xf]
  %v173 = vld [vmem:[%s1 + $0x16c] sm:$0xf]
  %v174 = vld [vmem:[%s1 + $0x170] sm:$0xf]
  %v175 = vld [vmem:[%s1 + $0x174] sm:$0xf]
  %v176 = vld [vmem:[%s1 + $0x178] sm:$0xf]
  %v177 = vld [vmem:[%s1 + $0x17c] sm:$0xf]
  %v178 = vld [vmem:[%s1 + $0x180] sm:$0xf]
  %v179 = vld [vmem:[%s1 + $0x184] sm:$0xf]
  %v180 = vld [vmem:[%s1 + $0x188] sm:$0xf]
  %v181 = vld [vmem:[%s1 + $0x18c] sm:$0xf]
  %v182 = vld [vmem:[%s1 + $0x190] sm:$0xf]
  %v183 = vld [vmem:[%s1 + $0x194] sm:$0xf]
  %v184 = vld [vmem:[%s1 + $0x198] sm:$0xf]
  %v185 = vld [vmem:[%s1 + $0x19c] sm:$0xf]
  %v186 = vld [vmem:[%s1 + $0x1a0] sm:$0xf]
  %v187 = vld [vmem:[%s1 + $0x1a4] sm:$0xf]
  %v188 = vld [vmem:[%s1 + $0x1a8] sm:$0xf]
  %v189 = vld [vmem:[%s1 + $0x1ac] sm:$0xf]
  %v190 = vld [vmem:[%s1 + $0x1b0] sm:$0xf]
  %v191 = vld [vmem:[%s1 + $0x1b4] sm:$0xf]
  %v192 = vld [vmem:[%s1 + $0x1b8] sm:$0xf]
  %v193 = vld [vmem:[%s1 + $0x1bc] sm:$0xf]
  %v194 = vld [vmem:[%s1 + $0x1c0] sm:$0xf]
  %v195 = vld [vmem:[%s1 + $0x1c4] sm:$0xf]
  %v196 = vld [vmem:[%s1 + $0x1c8] sm:$0xf]
  %v197 = vld [vmem:[%s1 + $0x1cc] sm:$0xf]
  %v198 = vld [vmem:[%s1 + $0x1d0] sm:$0xf]
  %v199 = vld [vmem:[%s1 + $0x1d4] sm:$0xf]
  %v200 = vld [vmem:[%s1 + $0x1d8] sm:$0xf]
  %v201 = vld [vmem:[%s1 + $0x1dc] sm:$0xf]
  %v266 = vunpack.c.l.b16 %v18
  %v267 = vunpack.c.h.b16 %v18
  %v268 = vunpack.c.l.b16 %v19
  %v269 = vunpack.c.h.b16 %v19
  %v270 = vunpack.c.l.b16 %v20
  %v271 = vunpack.c.h.b16 %v20
  %v272 = vunpack.c.l.b16 %v21
  %v273 = vunpack.c.h.b16 %v21
  %v274 = vunpack.c.l.b16 %v22
  %v275 = vunpack.c.h.b16 %v22
  %v276 = vunpack.c.l.b16 %v23
  %v277 = vunpack.c.h.b16 %v23
  %v278 = vunpack.c.l.b16 %v24
  %v279 = vunpack.c.h.b16 %v24
  %v280 = vunpack.c.l.b16 %v25
  %v281 = vunpack.c.h.b16 %v25
  %v282 = vunpack.c.l.b16 %v26
  %v283 = vunpack.c.h.b16 %v26
  %v284 = vunpack.c.l.b16 %v27
  %v285 = vunpack.c.h.b16 %v27
  %v286 = vunpack.c.l.b16 %v28
  %v287 = vunpack.c.h.b16 %v28
  %v288 = vunpack.c.l.b16 %v29
  %v289 = vunpack.c.h.b16 %v29
  %v290 = vunpack.c.l.b16 %v30
  %v291 = vunpack.c.h.b16 %v30
  %v292 = vunpack.c.l.b16 %v31
  %v293 = vunpack.c.h.b16 %v31
  %v294 = vunpack.c.l.b16 %v32
  %v295 = vunpack.c.h.b16 %v32
  %v296 = vunpack.c.l.b16 %v33
  %v297 = vunpack.c.h.b16 %v33
  %v298 = vunpack.c.l.b16 %v34
  %v299 = vunpack.c.h.b16 %v34
  %v300 = vunpack.c.l.b16 %v35
  %v301 = vunpack.c.h.b16 %v35
  %v302 = vunpack.c.l.b16 %v36
  %v303 = vunpack.c.h.b16 %v36
  %v304 = vunpack.c.l.b16 %v37
  %v305 = vunpack.c.h.b16 %v37
  %v306 = vunpack.c.l.b16 %v38
  %v307 = vunpack.c.h.b16 %v38
  %v308 = vunpack.c.l.b16 %v39
  %v309 = vunpack.c.h.b16 %v39
  %v310 = vunpack.c.l.b16 %v40
  %v311 = vunpack.c.h.b16 %v40
  %v312 = vunpack.c.l.b16 %v41
  %v313 = vunpack.c.h.b16 %v41
  %v314 = vunpack.c.l.b16 %v42
  %v315 = vunpack.c.h.b16 %v42
  %v316 = vunpack.c.l.b16 %v43
  %v317 = vunpack.c.h.b16 %v43
  %v318 = vunpack.c.l.b16 %v44
  %v319 = vunpack.c.h.b16 %v44
  %v320 = vunpack.c.l.b16 %v45
  %v321 = vunpack.c.h.b16 %v45
  %v322 = vunpack.c.l.b16 %v46
  %v323 = vunpack.c.h.b16 %v46
  %v324 = vunpack.c.l.b16 %v47
  %v325 = vunpack.c.h.b16 %v47
  %v326 = vunpack.c.l.b16 %v48
  %v327 = vunpack.c.h.b16 %v48
  %v328 = vunpack.c.l.b16 %v49
  %v329 = vunpack.c.h.b16 %v49
  %v330 = vunpack.c.l.b16 %v50
  %v331 = vunpack.c.h.b16 %v50
  %v332 = vunpack.c.l.b16 %v51
  %v333 = vunpack.c.h.b16 %v51
  %v334 = vunpack.c.l.b16 %v52
  %v335 = vunpack.c.h.b16 %v52
  %v336 = vunpack.c.l.b16 %v53
  %v337 = vunpack.c.h.b16 %v53
  %v338 = vunpack.c.l.b16 %v54
  %v339 = vunpack.c.h.b16 %v54
  %v340 = vunpack.c.l.b16 %v55
  %v341 = vunpack.c.h.b16 %v55
  %v342 = vunpack.c.l.b16 %v56
  %v343 = vunpack.c.h.b16 %v56
  %v344 = vunpack.c.l.b16 %v57
  %v345 = vunpack.c.h.b16 %v57
  %v346 = vunpack.c.l.b16 %v58
  %v347 = vunpack.c.h.b16 %v58
  %v348 = vunpack.c.l.b16 %v59
  %v349 = vunpack.c.h.b16 %v59
  %v350 = vunpack.c.l.b16 %v60
  %v351 = vunpack.c.h.b16 %v60
  %v352 = vunpack.c.l.b16 %v61
  %v353 = vunpack.c.h.b16 %v61
  %v354 = vunpack.c.l.b16 %v62
  %v355 = vunpack.c.h.b16 %v62
  %v356 = vunpack.c.l.b16 %v63
  %v357 = vunpack.c.h.b16 %v63
  %v358 = vunpack.c.l.b16 %v64
  %v359 = vunpack.c.h.b16 %v64
  %v360 = vunpack.c.l.b16 %v65
  %v361 = vunpack.c.h.b16 %v65
  %v362 = vunpack.c.l.b16 %v66
  %v363 = vunpack.c.h.b16 %v66
  %v364 = vunpack.c.l.b16 %v67
  %v365 = vunpack.c.h.b16 %v67
  %v366 = vunpack.c.l.b16 %v68
  %v367 = vunpack.c.h.b16 %v68
  %v368 = vunpack.c.l.b16 %v69
  %v369 = vunpack.c.h.b16 %v69
  %v370 = vunpack.c.l.b16 %v70
  %v371 = vunpack.c.h.b16 %v70
  %v372 = vunpack.c.l.b16 %v71
  %v373 = vunpack.c.h.b16 %v71
  %v374 = vunpack.c.l.b16 %v72
  %v375 = vunpack.c.h.b16 %v72
  %v376 = vunpack.c.l.b16 %v73
  %v377 = vunpack.c.h.b16 %v73
  %v378 = vunpack.c.l.b16 %v74
  %v379 = vunpack.c.h.b16 %v74
  %v380 = vunpack.c.l.b16 %v75
  %v381 = vunpack.c.h.b16 %v75
  %v382 = vunpack.c.l.b16 %v76
  %v383 = vunpack.c.h.b16 %v76
  %v384 = vunpack.c.l.b16 %v77
  %v385 = vunpack.c.h.b16 %v77
  %v386 = vunpack.c.l.b16 %v78
  %v387 = vunpack.c.h.b16 %v78
  %v388 = vunpack.c.l.b16 %v79
  %v389 = vunpack.c.h.b16 %v79
  %v390 = vunpack.c.l.b16 %v80
  %v391 = vunpack.c.h.b16 %v80
  %v392 = vunpack.c.l.b16 %v81
  %v393 = vunpack.c.h.b16 %v81
  %v394 = vpack.c.b16 %v274, %v266
  %v395 = vpack.c.b16 %v275, %v267
  %v396 = vpack.c.b16 %v276, %v268
  %v397 = vpack.c.b16 %v277, %v269
  %v398 = vpack.c.b16 %v278, %v270
  %v399 = vpack.c.b16 %v279, %v271
  %v400 = vpack.c.b16 %v280, %v272
  %v401 = vpack.c.b16 %v281, %v273
  %v402 = vpack.c.b16 %v290, %v282
  %v403 = vpack.c.b16 %v291, %v283
  %v404 = vpack.c.b16 %v292, %v284
  %v405 = vpack.c.b16 %v293, %v285
  %v406 = vpack.c.b16 %v294, %v286
  %v407 = vpack.c.b16 %v295, %v287
  %v408 = vpack.c.b16 %v296, %v288
  %v409 = vpack.c.b16 %v297, %v289
  %v410 = vpack.c.b16 %v306, %v298
  %v411 = vpack.c.b16 %v307, %v299
  %v412 = vpack.c.b16 %v308, %v300
  %v413 = vpack.c.b16 %v309, %v301
  %v414 = vpack.c.b16 %v310, %v302
  %v415 = vpack.c.b16 %v311, %v303
  %v416 = vpack.c.b16 %v312, %v304
  %v417 = vpack.c.b16 %v313, %v305
  %v418 = vpack.c.b16 %v322, %v314
  %v419 = vpack.c.b16 %v323, %v315
  %v420 = vpack.c.b16 %v324, %v316
  %v421 = vpack.c.b16 %v325, %v317
  %v422 = vpack.c.b16 %v326, %v318
  %v423 = vpack.c.b16 %v327, %v319
  %v424 = vpack.c.b16 %v328, %v320
  %v425 = vpack.c.b16 %v329, %v321
  %v426 = vpack.c.b16 %v338, %v330
  %v427 = vpack.c.b16 %v339, %v331
  %v428 = vpack.c.b16 %v340, %v332
  %v429 = vpack.c.b16 %v341, %v333
  %v430 = vpack.c.b16 %v342, %v334
  %v431 = vpack.c.b16 %v343, %v335
  %v432 = vpack.c.b16 %v344, %v336
  %v433 = vpack.c.b16 %v345, %v337
  %v434 = vpack.c.b16 %v354, %v346
  %v435 = vpack.c.b16 %v355, %v347
  %v436 = vpack.c.b16 %v356, %v348
  %v437 = vpack.c.b16 %v357, %v349
  %v438 = vpack.c.b16 %v358, %v350
  %v439 = vpack.c.b16 %v359, %v351
  %v440 = vpack.c.b16 %v360, %v352
  %v441 = vpack.c.b16 %v361, %v353
  %v442 = vpack.c.b16 %v370, %v362
  %v443 = vpack.c.b16 %v371, %v363
  %v444 = vpack.c.b16 %v372, %v364
  %v445 = vpack.c.b16 %v373, %v365
  %v446 = vpack.c.b16 %v374, %v366
  %v447 = vpack.c.b16 %v375, %v367
  %v448 = vpack.c.b16 %v376, %v368
  %v449 = vpack.c.b16 %v377, %v369
  %v450 = vpack.c.b16 %v386, %v378
  %v451 = vpack.c.b16 %v387, %v379
  %v452 = vpack.c.b16 %v388, %v380
  %v453 = vpack.c.b16 %v389, %v381
  %v454 = vpack.c.b16 %v390, %v382
  %v455 = vpack.c.b16 %v391, %v383
  %v456 = vpack.c.b16 %v392, %v384
  %v457 = vpack.c.b16 %v393, %v385
  %v634 = vunpack.c.l.b16 %v82
  %v635 = vunpack.c.l.b16 %v83
  %v636 = vunpack.c.l.b16 %v84
  %v637 = vunpack.c.l.b16 %v85
  %v638 = vunpack.c.l.b16 %v86
  %v639 = vunpack.c.l.b16 %v87
  %v640 = vunpack.c.l.b16 %v88
  %v641 = vunpack.c.l.b16 %v89
  %v642 = vunpack.c.l.b16 %v90
  %v643 = vunpack.c.l.b16 %v91
  %v644 = vunpack.c.l.b16 %v92
  %v645 = vunpack.c.l.b16 %v93
  %v646 = vunpack.c.l.b16 %v94
  %v647 = vunpack.c.l.b16 %v95
  %v648 = vunpack.c.l.b16 %v96
  %v649 = vunpack.c.l.b16 %v97
  %v650 = vunpack.c.l.b16 %v98
  %v651 = vunpack.c.l.b16 %v99
  %v652 = vunpack.c.l.b16 %v100
  %v653 = vunpack.c.l.b16 %v101
  %v654 = vunpack.c.l.b16 %v102
  %v655 = vunpack.c.l.b16 %v103
  %v656 = vunpack.c.l.b16 %v104
  %v657 = vunpack.c.l.b16 %v105
  %v658 = vunpack.c.l.b16 %v106
  %v659 = vunpack.c.l.b16 %v107
  %v660 = vunpack.c.l.b16 %v108
  %v661 = vunpack.c.l.b16 %v109
  %v662 = vunpack.c.l.b16 %v110
  %v663 = vunpack.c.l.b16 %v111
  %v664 = vunpack.c.l.b16 %v112
  %v665 = vunpack.c.l.b16 %v113
  %v666 = vunpack.c.l.b16 %v114
  %v667 = vunpack.c.l.b16 %v115
  %v668 = vunpack.c.l.b16 %v116
  %v669 = vunpack.c.l.b16 %v117
  %v670 = vunpack.c.l.b16 %v118
  %v671 = vunpack.c.l.b16 %v119
  %v672 = vunpack.c.l.b16 %v120
  %v673 = vunpack.c.l.b16 %v121
  %v674 = vunpack.c.l.b16 %v122
  %v675 = vunpack.c.l.b16 %v123
  %v676 = vunpack.c.l.b16 %v124
  %v677 = vunpack.c.l.b16 %v125
  %v678 = vunpack.c.l.b16 %v126
  %v679 = vunpack.c.l.b16 %v127
  %v680 = vunpack.c.l.b16 %v128
  %v681 = vunpack.c.l.b16 %v129
  %v682 = vunpack.c.l.b16 %v130
  %v683 = vunpack.c.l.b16 %v131
  %v684 = vunpack.c.l.b16 %v132
  %v685 = vunpack.c.l.b16 %v133
  %v686 = vunpack.c.l.b16 %v134
  %v687 = vunpack.c.l.b16 %v135
  %v688 = vunpack.c.l.b16 %v136
  %v689 = vunpack.c.l.b16 %v137
  %v690 = vunpack.c.l.b16 %v138
  %v691 = vunpack.c.l.b16 %v139
  %v692 = vunpack.c.l.b16 %v140
  %v693 = vunpack.c.l.b16 %v141
  %v694 = vunpack.c.l.b16 %v142
  %v695 = vunpack.c.l.b16 %v143
  %v696 = vunpack.c.l.b16 %v144
  %v697 = vunpack.c.l.b16 %v145
  %v698 = vunpack.c.l.b16 %v146
  %v699 = vunpack.c.l.b16 %v147
  %v700 = vunpack.c.l.b16 %v148
  %v701 = vunpack.c.l.b16 %v149
  %v702 = vunpack.c.l.b16 %v150
  %v703 = vunpack.c.l.b16 %v151
  %v704 = vunpack.c.l.b16 %v152
  %v705 = vunpack.c.l.b16 %v153
  %v706 = vunpack.c.l.b16 %v154
  %v707 = vunpack.c.l.b16 %v155
  %v708 = vunpack.c.l.b16 %v156
  %v709 = vunpack.c.l.b16 %v157
  %v710 = vunpack.c.l.b16 %v158
  %v711 = vunpack.c.l.b16 %v159
  %v712 = vunpack.c.l.b16 %v160
  %v713 = vunpack.c.l.b16 %v161
  %v714 = vunpack.c.l.b16 %v162
  %v715 = vunpack.c.l.b16 %v163
  %v716 = vunpack.c.l.b16 %v164
  %v717 = vunpack.c.l.b16 %v165
  %v718 = vunpack.c.l.b16 %v166
  %v719 = vunpack.c.l.b16 %v167
  %v720 = vunpack.c.l.b16 %v168
  %v721 = vunpack.c.l.b16 %v169
  %v722 = vunpack.c.l.b16 %v170
  %v723 = vunpack.c.l.b16 %v171
  %v724 = vunpack.c.l.b16 %v172
  %v725 = vunpack.c.l.b16 %v173
  %v726 = vunpack.c.l.b16 %v174
  %v727 = vunpack.c.l.b16 %v175
  %v728 = vunpack.c.l.b16 %v176
  %v729 = vunpack.c.l.b16 %v177
  %v730 = vunpack.c.l.b16 %v178
  %v731 = vunpack.c.l.b16 %v179
  %v732 = vunpack.c.l.b16 %v180
  %v733 = vunpack.c.l.b16 %v181
  %v734 = vunpack.c.l.b16 %v182
  %v735 = vunpack.c.l.b16 %v183
  %v736 = vunpack.c.l.b16 %v184
  %v737 = vunpack.c.l.b16 %v185
  %v738 = vunpack.c.l.b16 %v186
  %v739 = vunpack.c.l.b16 %v187
  %v740 = vunpack.c.l.b16 %v188
  %v741 = vunpack.c.l.b16 %v189
  %v742 = vunpack.c.l.b16 %v190
  %v743 = vunpack.c.l.b16 %v191
  %v744 = vunpack.c.l.b16 %v192
  %v745 = vunpack.c.l.b16 %v193
  %v746 = vunpack.c.l.b16 %v194
  %v747 = vunpack.c.l.b16 %v195
  %v748 = vunpack.c.l.b16 %v196
  %v749 = vunpack.c.l.b16 %v197
  %v750 = vunpack.c.l.b16 %v198
  %v751 = vunpack.c.l.b16 %v199
  %v752 = vunpack.c.l.b16 %v200
  %v753 = vunpack.c.l.b16 %v201
  %v754 = vpack.c.b16 %v635, %v634
  %v755 = vpack.c.b16 %v637, %v636
  %v756 = vpack.c.b16 %v639, %v638
  %v757 = vpack.c.b16 %v641, %v640
  %v758 = vpack.c.b16 %v643, %v642
  %v759 = vpack.c.b16 %v645, %v644
  %v760 = vpack.c.b16 %v647, %v646
  %v761 = vpack.c.b16 %v649, %v648
  %v762 = vpack.c.b16 %v651, %v650
  %v763 = vpack.c.b16 %v653, %v652
  %v764 = vpack.c.b16 %v655, %v654
  %v765 = vpack.c.b16 %v657, %v656
  %v766 = vpack.c.b16 %v659, %v658
  %v767 = vpack.c.b16 %v661, %v660
  %v768 = vpack.c.b16 %v663, %v662
  %v769 = vpack.c.b16 %v665, %v664
  %v770 = vpack.c.b16 %v667, %v666
  %v771 = vpack.c.b16 %v669, %v668
  %v772 = vpack.c.b16 %v671, %v670
  %v773 = vpack.c.b16 %v673, %v672
  %v774 = vpack.c.b16 %v675, %v674
  %v775 = vpack.c.b16 %v677, %v676
  %v776 = vpack.c.b16 %v679, %v678
  %v777 = vpack.c.b16 %v681, %v680
  %v778 = vpack.c.b16 %v683, %v682
  %v779 = vpack.c.b16 %v685, %v684
  %v780 = vpack.c.b16 %v687, %v686
  %v781 = vpack.c.b16 %v689, %v688
  %v782 = vpack.c.b16 %v691, %v690
  %v783 = vpack.c.b16 %v693, %v692
  %v784 = vpack.c.b16 %v695, %v694
  %v785 = vpack.c.b16 %v697, %v696
  %v786 = vpack.c.b16 %v699, %v698
  %v787 = vpack.c.b16 %v701, %v700
  %v788 = vpack.c.b16 %v703, %v702
  %v789 = vpack.c.b16 %v705, %v704
  %v790 = vpack.c.b16 %v707, %v706
  %v791 = vpack.c.b16 %v709, %v708
  %v792 = vpack.c.b16 %v711, %v710
  %v793 = vpack.c.b16 %v713, %v712
  %v794 = vpack.c.b16 %v715, %v714
  %v795 = vpack.c.b16 %v717, %v716
  %v796 = vpack.c.b16 %v719, %v718
  %v797 = vpack.c.b16 %v721, %v720
  %v798 = vpack.c.b16 %v723, %v722
  %v799 = vpack.c.b16 %v725, %v724
  %v800 = vpack.c.b16 %v727, %v726
  %v801 = vpack.c.b16 %v729, %v728
  %v802 = vpack.c.b16 %v731, %v730
  %v803 = vpack.c.b16 %v733, %v732
  %v804 = vpack.c.b16 %v735, %v734
  %v805 = vpack.c.b16 %v737, %v736
  %v806 = vpack.c.b16 %v739, %v738
  %v807 = vpack.c.b16 %v741, %v740
  %v808 = vpack.c.b16 %v743, %v742
  %v809 = vpack.c.b16 %v745, %v744
  %v810 = vpack.c.b16 %v747, %v746
  %v811 = vpack.c.b16 %v749, %v748
  %v812 = vpack.c.b16 %v751, %v750
  %v813 = vpack.c.b16 %v753, %v752
  %vm874 = vcmask 523264
  %v876 = vsel %vm874, %v401, 0
  %v879 = vsel %vm874, %v409, 0
  %v882 = vsel %vm874, %v417, 0
  %v885 = vsel %vm874, %v425, 0
  %v888 = vsel %vm874, %v433, 0
  %v891 = vsel %vm874, %v441, 0
  %v894 = vsel %vm874, %v449, 0
  %v897 = vsel %vm874, %v457, 0
  %899 = vmatpush.bf16.msra.mxu0 %v761
  %900 = vmatpush.bf16.msra.mxu0 %v760
  %901 = vmatpush.bf16.msra.mxu0 %v759
  %902 = vmatpush.bf16.msra.mxu0 %v758
  %903 = vmatpush.bf16.msra.mxu0 %v757
  %904 = vmatpush.bf16.msra.mxu0 %v756
  %905 = vmatpush.bf16.msra.mxu0 %v755
  %906 = vmatpush.bf16.msra.mxu0 %v754
  %907 = vmatmul.bf16.gmra.mxu0 %v394
  %v908 = vpop.f32.mrf.mxu0
  %v909 = vadd.f32 0.0, %v908
  %v910 = vpop.f32.mrf.mxu0
  %v911 = vadd.f32 0.0, %v910
  %912 = vmatmul.bf16.gmra.mxu0 %v402
  %v913 = vpop.f32.mrf.mxu0
  %v914 = vadd.f32 0.0, %v913
  %v915 = vpop.f32.mrf.mxu0
  %v916 = vadd.f32 0.0, %v915
  %917 = vmatmul.bf16.gmra.mxu0 %v410
  %v918 = vpop.f32.mrf.mxu0
  %v919 = vadd.f32 0.0, %v918
  %v920 = vpop.f32.mrf.mxu0
  %v921 = vadd.f32 0.0, %v920
  %922 = vmatmul.bf16.gmra.mxu0 %v418
  %v923 = vpop.f32.mrf.mxu0
  %v924 = vadd.f32 0.0, %v923
  %v925 = vpop.f32.mrf.mxu0
  %v926 = vadd.f32 0.0, %v925
  %927 = vmatmul.bf16.gmra.mxu0 %v426
  %v928 = vpop.f32.mrf.mxu0
  %v929 = vadd.f32 0.0, %v928
  %v930 = vpop.f32.mrf.mxu0
  %v931 = vadd.f32 0.0, %v930
  %932 = vmatmul.bf16.gmra.mxu0 %v434
  %v933 = vpop.f32.mrf.mxu0
  %v934 = vadd.f32 0.0, %v933
  %v935 = vpop.f32.mrf.mxu0
  %v936 = vadd.f32 0.0, %v935
  %937 = vmatmul.bf16.gmra.mxu0 %v442
  %v938 = vpop.f32.mrf.mxu0
  %v939 = vadd.f32 0.0, %v938
  %v940 = vpop.f32.mrf.mxu0
  %v941 = vadd.f32 0.0, %v940
  %942 = vmatmul.bf16.gmra.mxu0 %v450
  %v943 = vpop.f32.mrf.mxu0
  %v944 = vadd.f32 0.0, %v943
  %v945 = vpop.f32.mrf.mxu0
  %v946 = vadd.f32 0.0, %v945
  %947 = vdwg.mxu0
  %948 = vmatpush.bf16.msra.mxu0 %v769
  %949 = vmatpush.bf16.msra.mxu0 %v768
  %950 = vmatpush.bf16.msra.mxu0 %v767
  %951 = vmatpush.bf16.msra.mxu0 %v766
  %952 = vmatpush.bf16.msra.mxu0 %v765
  %953 = vmatpush.bf16.msra.mxu0 %v764
  %954 = vmatpush.bf16.msra.mxu0 %v763
  %955 = vmatpush.bf16.msra.mxu0 %v762
  %956 = vmatmul.bf16.gmra.mxu0 %v395
  %v957 = vpop.f32.mrf.mxu0
  %v958 = vadd.f32 %v909, %v957
  %v959 = vpop.f32.mrf.mxu0
  %v960 = vadd.f32 %v911, %v959
  %961 = vmatmul.bf16.gmra.mxu0 %v403
  %v962 = vpop.f32.mrf.mxu0
  %v963 = vadd.f32 %v914, %v962
  %v964 = vpop.f32.mrf.mxu0
  %v965 = vadd.f32 %v916, %v964
  %966 = vmatmul.bf16.gmra.mxu0 %v411
  %v967 = vpop.f32.mrf.mxu0
  %v968 = vadd.f32 %v919, %v967
  %v969 = vpop.f32.mrf.mxu0
  %v970 = vadd.f32 %v921, %v969
  %971 = vmatmul.bf16.gmra.mxu0 %v419
  %v972 = vpop.f32.mrf.mxu0
  %v973 = vadd.f32 %v924, %v972
  %v974 = vpop.f32.mrf.mxu0
  %v975 = vadd.f32 %v926, %v974
  %976 = vmatmul.bf16.gmra.mxu0 %v427
  %v977 = vpop.f32.mrf.mxu0
  %v978 = vadd.f32 %v929, %v977
  %v979 = vpop.f32.mrf.mxu0
  %v980 = vadd.f32 %v931, %v979
  %981 = vmatmul.bf16.gmra.mxu0 %v435
  %v982 = vpop.f32.mrf.mxu0
  %v983 = vadd.f32 %v934, %v982
  %v984 = vpop.f32.mrf.mxu0
  %v985 = vadd.f32 %v936, %v984
  %986 = vmatmul.bf16.gmra.mxu0 %v443
  %v987 = vpop.f32.mrf.mxu0
  %v988 = vadd.f32 %v939, %v987
  %v989 = vpop.f32.mrf.mxu0
  %v990 = vadd.f32 %v941, %v989
  %991 = vmatmul.bf16.gmra.mxu0 %v451
  %v992 = vpop.f32.mrf.mxu0
  %v993 = vadd.f32 %v944, %v992
  %v994 = vpop.f32.mrf.mxu0
  %v995 = vadd.f32 %v946, %v994
  %996 = vdwg.mxu0
  %997 = vmatpush.bf16.msra.mxu0 %v777
  %998 = vmatpush.bf16.msra.mxu0 %v776
  %999 = vmatpush.bf16.msra.mxu0 %v775
  %1000 = vmatpush.bf16.msra.mxu0 %v774
  %1001 = vmatpush.bf16.msra.mxu0 %v773
  %1002 = vmatpush.bf16.msra.mxu0 %v772
  %1003 = vmatpush.bf16.msra.mxu0 %v771
  %1004 = vmatpush.bf16.msra.mxu0 %v770
  %1005 = vmatmul.bf16.gmra.mxu0 %v396
  %v1006 = vpop.f32.mrf.mxu0
  %v1007 = vadd.f32 %v958, %v1006
  %v1008 = vpop.f32.mrf.mxu0
  %v1009 = vadd.f32 %v960, %v1008
  %1010 = vmatmul.bf16.gmra.mxu0 %v404
  %v1011 = vpop.f32.mrf.mxu0
  %v1012 = vadd.f32 %v963, %v1011
  %v1013 = vpop.f32.mrf.mxu0
  %v1014 = vadd.f32 %v965, %v1013
  %1015 = vmatmul.bf16.gmra.mxu0 %v412
  %v1016 = vpop.f32.mrf.mxu0
  %v1017 = vadd.f32 %v968, %v1016
  %v1018 = vpop.f32.mrf.mxu0
  %v1019 = vadd.f32 %v970, %v1018
  %1020 = vmatmul.bf16.gmra.mxu0 %v420
  %v1021 = vpop.f32.mrf.mxu0
  %v1022 = vadd.f32 %v973, %v1021
  %v1023 = vpop.f32.mrf.mxu0
  %v1024 = vadd.f32 %v975, %v1023
  %1025 = vmatmul.bf16.gmra.mxu0 %v428
  %v1026 = vpop.f32.mrf.mxu0
  %v1027 = vadd.f32 %v978, %v1026
  %v1028 = vpop.f32.mrf.mxu0
  %v1029 = vadd.f32 %v980, %v1028
  %1030 = vmatmul.bf16.gmra.mxu0 %v436
  %v1031 = vpop.f32.mrf.mxu0
  %v1032 = vadd.f32 %v983, %v1031
  %v1033 = vpop.f32.mrf.mxu0
  %v1034 = vadd.f32 %v985, %v1033
  %1035 = vmatmul.bf16.gmra.mxu0 %v444
  %v1036 = vpop.f32.mrf.mxu0
  %v1037 = vadd.f32 %v988, %v1036
  %v1038 = vpop.f32.mrf.mxu0
  %v1039 = vadd.f32 %v990, %v1038
  %1040 = vmatmul.bf16.gmra.mxu0 %v452
  %v1041 = vpop.f32.mrf.mxu0
  %v1042 = vadd.f32 %v993, %v1041
  %v1043 = vpop.f32.mrf.mxu0
  %v1044 = vadd.f32 %v995, %v1043
  %1045 = vdwg.mxu0
  %1046 = vmatpush.bf16.msra.mxu0 %v785
  %1047 = vmatpush.bf16.msra.mxu0 %v784
  %1048 = vmatpush.bf16.msra.mxu0 %v783
  %1049 = vmatpush.bf16.msra.mxu0 %v782
  %1050 = vmatpush.bf16.msra.mxu0 %v781
  %1051 = vmatpush.bf16.msra.mxu0 %v780
  %1052 = vmatpush.bf16.msra.mxu0 %v779
  %1053 = vmatpush.bf16.msra.mxu0 %v778
  %1054 = vmatmul.bf16.gmra.mxu0 %v397
  %v1055 = vpop.f32.mrf.mxu0
  %v1056 = vadd.f32 %v1007, %v1055
  %v1057 = vpop.f32.mrf.mxu0
  %v1058 = vadd.f32 %v1009, %v1057
  %1059 = vmatmul.bf16.gmra.mxu0 %v405
  %v1060 = vpop.f32.mrf.mxu0
  %v1061 = vadd.f32 %v1012, %v1060
  %v1062 = vpop.f32.mrf.mxu0
  %v1063 = vadd.f32 %v1014, %v1062
  %1064 = vmatmul.bf16.gmra.mxu0 %v413
  %v1065 = vpop.f32.mrf.mxu0
  %v1066 = vadd.f32 %v1017, %v1065
  %v1067 = vpop.f32.mrf.mxu0
  %v1068 = vadd.f32 %v1019, %v1067
  %1069 = vmatmul.bf16.gmra.mxu0 %v421
  %v1070 = vpop.f32.mrf.mxu0
  %v1071 = vadd.f32 %v1022, %v1070
  %v1072 = vpop.f32.mrf.mxu0
  %v1073 = vadd.f32 %v1024, %v1072
  %1074 = vmatmul.bf16.gmra.mxu0 %v429
  %v1075 = vpop.f32.mrf.mxu0
  %v1076 = vadd.f32 %v1027, %v1075
  %v1077 = vpop.f32.mrf.mxu0
  %v1078 = vadd.f32 %v1029, %v1077
  %1079 = vmatmul.bf16.gmra.mxu0 %v437
  %v1080 = vpop.f32.mrf.mxu0
  %v1081 = vadd.f32 %v1032, %v1080
  %v1082 = vpop.f32.mrf.mxu0
  %v1083 = vadd.f32 %v1034, %v1082
  %1084 = vmatmul.bf16.gmra.mxu0 %v445
  %v1085 = vpop.f32.mrf.mxu0
  %v1086 = vadd.f32 %v1037, %v1085
  %v1087 = vpop.f32.mrf.mxu0
  %v1088 = vadd.f32 %v1039, %v1087
  %1089 = vmatmul.bf16.gmra.mxu0 %v453
  %v1090 = vpop.f32.mrf.mxu0
  %v1091 = vadd.f32 %v1042, %v1090
  %v1092 = vpop.f32.mrf.mxu0
  %v1093 = vadd.f32 %v1044, %v1092
  %1094 = vdwg.mxu0
  %1095 = vmatpush.bf16.msra.mxu0 %v793
  %1096 = vmatpush.bf16.msra.mxu0 %v792
  %1097 = vmatpush.bf16.msra.mxu0 %v791
  %1098 = vmatpush.bf16.msra.mxu0 %v790
  %1099 = vmatpush.bf16.msra.mxu0 %v789
  %1100 = vmatpush.bf16.msra.mxu0 %v788
  %1101 = vmatpush.bf16.msra.mxu0 %v787
  %1102 = vmatpush.bf16.msra.mxu0 %v786
  %1103 = vmatmul.bf16.gmra.mxu0 %v398
  %v1104 = vpop.f32.mrf.mxu0
  %v1105 = vadd.f32 %v1056, %v1104
  %v1106 = vpop.f32.mrf.mxu0
  %v1107 = vadd.f32 %v1058, %v1106
  %1108 = vmatmul.bf16.gmra.mxu0 %v406
  %v1109 = vpop.f32.mrf.mxu0
  %v1110 = vadd.f32 %v1061, %v1109
  %v1111 = vpop.f32.mrf.mxu0
  %v1112 = vadd.f32 %v1063, %v1111
  %1113 = vmatmul.bf16.gmra.mxu0 %v414
  %v1114 = vpop.f32.mrf.mxu0
  %v1115 = vadd.f32 %v1066, %v1114
  %v1116 = vpop.f32.mrf.mxu0
  %v1117 = vadd.f32 %v1068, %v1116
  %1118 = vmatmul.bf16.gmra.mxu0 %v422
  %v1119 = vpop.f32.mrf.mxu0
  %v1120 = vadd.f32 %v1071, %v1119
  %v1121 = vpop.f32.mrf.mxu0
  %v1122 = vadd.f32 %v1073, %v1121
  %1123 = vmatmul.bf16.gmra.mxu0 %v430
  %v1124 = vpop.f32.mrf.mxu0
  %v1125 = vadd.f32 %v1076, %v1124
  %v1126 = vpop.f32.mrf.mxu0
  %v1127 = vadd.f32 %v1078, %v1126
  %1128 = vmatmul.bf16.gmra.mxu0 %v438
  %v1129 = vpop.f32.mrf.mxu0
  %v1130 = vadd.f32 %v1081, %v1129
  %v1131 = vpop.f32.mrf.mxu0
  %v1132 = vadd.f32 %v1083, %v1131
  %1133 = vmatmul.bf16.gmra.mxu0 %v446
  %v1134 = vpop.f32.mrf.mxu0
  %v1135 = vadd.f32 %v1086, %v1134
  %v1136 = vpop.f32.mrf.mxu0
  %v1137 = vadd.f32 %v1088, %v1136
  %1138 = vmatmul.bf16.gmra.mxu0 %v454
  %v1139 = vpop.f32.mrf.mxu0
  %v1140 = vadd.f32 %v1091, %v1139
  %v1141 = vpop.f32.mrf.mxu0
  %v1142 = vadd.f32 %v1093, %v1141
  %1143 = vdwg.mxu0
  %1144 = vmatpush.bf16.msra.mxu0 %v801
  %1145 = vmatpush.bf16.msra.mxu0 %v800
  %1146 = vmatpush.bf16.msra.mxu0 %v799
  %1147 = vmatpush.bf16.msra.mxu0 %v798
  %1148 = vmatpush.bf16.msra.mxu0 %v797
  %1149 = vmatpush.bf16.msra.mxu0 %v796
  %1150 = vmatpush.bf16.msra.mxu0 %v795
  %1151 = vmatpush.bf16.msra.mxu0 %v794
  %1152 = vmatmul.bf16.gmra.mxu0 %v399
  %v1153 = vpop.f32.mrf.mxu0
  %v1154 = vadd.f32 %v1105, %v1153
  %v1155 = vpop.f32.mrf.mxu0
  %v1156 = vadd.f32 %v1107, %v1155
  %1157 = vmatmul.bf16.gmra.mxu0 %v407
  %v1158 = vpop.f32.mrf.mxu0
  %v1159 = vadd.f32 %v1110, %v1158
  %v1160 = vpop.f32.mrf.mxu0
  %v1161 = vadd.f32 %v1112, %v1160
  %1162 = vmatmul.bf16.gmra.mxu0 %v415
  %v1163 = vpop.f32.mrf.mxu0
  %v1164 = vadd.f32 %v1115, %v1163
  %v1165 = vpop.f32.mrf.mxu0
  %v1166 = vadd.f32 %v1117, %v1165
  %1167 = vmatmul.bf16.gmra.mxu0 %v423
  %v1168 = vpop.f32.mrf.mxu0
  %v1169 = vadd.f32 %v1120, %v1168
  %v1170 = vpop.f32.mrf.mxu0
  %v1171 = vadd.f32 %v1122, %v1170
  %1172 = vmatmul.bf16.gmra.mxu0 %v431
  %v1173 = vpop.f32.mrf.mxu0
  %v1174 = vadd.f32 %v1125, %v1173
  %v1175 = vpop.f32.mrf.mxu0
  %v1176 = vadd.f32 %v1127, %v1175
  %1177 = vmatmul.bf16.gmra.mxu0 %v439
  %v1178 = vpop.f32.mrf.mxu0
  %v1179 = vadd.f32 %v1130, %v1178
  %v1180 = vpop.f32.mrf.mxu0
  %v1181 = vadd.f32 %v1132, %v1180
  %1182 = vmatmul.bf16.gmra.mxu0 %v447
  %v1183 = vpop.f32.mrf.mxu0
  %v1184 = vadd.f32 %v1135, %v1183
  %v1185 = vpop.f32.mrf.mxu0
  %v1186 = vadd.f32 %v1137, %v1185
  %1187 = vmatmul.bf16.gmra.mxu0 %v455
  %v1188 = vpop.f32.mrf.mxu0
  %v1189 = vadd.f32 %v1140, %v1188
  %v1190 = vpop.f32.mrf.mxu0
  %v1191 = vadd.f32 %v1142, %v1190
  %1192 = vdwg.mxu0
  %1193 = vmatpush.bf16.msra.mxu0 %v809
  %1194 = vmatpush.bf16.msra.mxu0 %v808
  %1195 = vmatpush.bf16.msra.mxu0 %v807
  %1196 = vmatpush.bf16.msra.mxu0 %v806
  %1197 = vmatpush.bf16.msra.mxu0 %v805
  %1198 = vmatpush.bf16.msra.mxu0 %v804
  %1199 = vmatpush.bf16.msra.mxu0 %v803
  %1200 = vmatpush.bf16.msra.mxu0 %v802
  %1201 = vmatmul.bf16.gmra.mxu0 %v400
  %v1202 = vpop.f32.mrf.mxu0
  %v1203 = vadd.f32 %v1154, %v1202
  %v1204 = vpop.f32.mrf.mxu0
  %v1205 = vadd.f32 %v1156, %v1204
  %1206 = vmatmul.bf16.gmra.mxu0 %v408
  %v1207 = vpop.f32.mrf.mxu0
  %v1208 = vadd.f32 %v1159, %v1207
  %v1209 = vpop.f32.mrf.mxu0
  %v1210 = vadd.f32 %v1161, %v1209
  %1211 = vmatmul.bf16.gmra.mxu0 %v416
  %v1212 = vpop.f32.mrf.mxu0
  %v1213 = vadd.f32 %v1164, %v1212
  %v1214 = vpop.f32.mrf.mxu0
  %v1215 = vadd.f32 %v1166, %v1214
  %1216 = vmatmul.bf16.gmra.mxu0 %v424
  %v1217 = vpop.f32.mrf.mxu0
  %v1218 = vadd.f32 %v1169, %v1217
  %v1219 = vpop.f32.mrf.mxu0
  %v1220 = vadd.f32 %v1171, %v1219
  %1221 = vmatmul.bf16.gmra.mxu0 %v432
  %v1222 = vpop.f32.mrf.mxu0
  %v1223 = vadd.f32 %v1174, %v1222
  %v1224 = vpop.f32.mrf.mxu0
  %v1225 = vadd.f32 %v1176, %v1224
  %1226 = vmatmul.bf16.gmra.mxu0 %v440
  %v1227 = vpop.f32.mrf.mxu0
  %v1228 = vadd.f32 %v1179, %v1227
  %v1229 = vpop.f32.mrf.mxu0
  %v1230 = vadd.f32 %v1181, %v1229
  %1231 = vmatmul.bf16.gmra.mxu0 %v448
  %v1232 = vpop.f32.mrf.mxu0
  %v1233 = vadd.f32 %v1184, %v1232
  %v1234 = vpop.f32.mrf.mxu0
  %v1235 = vadd.f32 %v1186, %v1234
  %1236 = vmatmul.bf16.gmra.mxu0 %v456
  %v1237 = vpop.f32.mrf.mxu0
  %v1238 = vadd.f32 %v1189, %v1237
  %v1239 = vpop.f32.mrf.mxu0
  %v1240 = vadd.f32 %v1191, %v1239
  %1241 = vdwg.mxu0
  %1242 = vmatpush.bf16.msra.mxu0 0
  %1243 = vmatpush.bf16.msra.mxu0 0
  %1244 = vmatpush.bf16.msra.mxu0 0
  %1245 = vmatpush.bf16.msra.mxu0 0
  %1246 = vmatpush.bf16.msra.mxu0 %v813
  %1247 = vmatpush.bf16.msra.mxu0 %v812
  %1248 = vmatpush.bf16.msra.mxu0 %v811
  %1249 = vmatpush.bf16.msra.mxu0 %v810
  %1250 = vmatmul.bf16.gmra.mxu0 %v876
  %v1251 = vpop.f32.mrf.mxu0
  %v1252 = vadd.f32 %v1203, %v1251
  %v1253 = vpop.f32.mrf.mxu0
  %v1254 = vadd.f32 %v1205, %v1253
  %1255 = vmatmul.bf16.gmra.mxu0 %v879
  %v1256 = vpop.f32.mrf.mxu0
  %v1257 = vadd.f32 %v1208, %v1256
  %v1258 = vpop.f32.mrf.mxu0
  %v1259 = vadd.f32 %v1210, %v1258
  %1260 = vmatmul.bf16.gmra.mxu0 %v882
  %v1261 = vpop.f32.mrf.mxu0
  %v1262 = vadd.f32 %v1213, %v1261
  %v1263 = vpop.f32.mrf.mxu0
  %v1264 = vadd.f32 %v1215, %v1263
  %1265 = vmatmul.bf16.gmra.mxu0 %v885
  %v1266 = vpop.f32.mrf.mxu0
  %v1267 = vadd.f32 %v1218, %v1266
  %v1268 = vpop.f32.mrf.mxu0
  %v1269 = vadd.f32 %v1220, %v1268
  %1270 = vmatmul.bf16.gmra.mxu0 %v888
  %v1271 = vpop.f32.mrf.mxu0
  %v1272 = vadd.f32 %v1223, %v1271
  %v1273 = vpop.f32.mrf.mxu0
  %v1274 = vadd.f32 %v1225, %v1273
  %1275 = vmatmul.bf16.gmra.mxu0 %v891
  %v1276 = vpop.f32.mrf.mxu0
  %v1277 = vadd.f32 %v1228, %v1276
  %v1278 = vpop.f32.mrf.mxu0
  %v1279 = vadd.f32 %v1230, %v1278
  %1280 = vmatmul.bf16.gmra.mxu0 %v894
  %v1281 = vpop.f32.mrf.mxu0
  %v1282 = vadd.f32 %v1233, %v1281
  %v1283 = vpop.f32.mrf.mxu0
  %v1284 = vadd.f32 %v1235, %v1283
  %1285 = vmatmul.bf16.gmra.mxu0 %v897
  %v1286 = vpop.f32.mrf.mxu0
  %v1287 = vadd.f32 %v1238, %v1286
  %v1288 = vpop.f32.mrf.mxu0
  %v1289 = vadd.f32 %v1240, %v1288
  %1290 = vdwg.mxu0
  %vm1291 = vcmask 400384
  %v1292 = vsel %vm1291, %v1252, 0.0
  %1293 = vadd.xlane.f32.xlu0 %v1292
  %v1294 = vpop.xlane.xlu0 %1293
  %v1295 = vsel %vm1291, %v1254, 0.0
  %1296 = vadd.xlane.f32.xlu0 %v1295
  %v1297 = vpop.xlane.xlu0 %1296
  %v1298 = vsel %vm1291, %v1257, 0.0
  %1299 = vadd.xlane.f32.xlu0 %v1298
  %v1300 = vpop.xlane.xlu0 %1299
  %v1301 = vsel %vm1291, %v1259, 0.0
  %1302 = vadd.xlane.f32.xlu0 %v1301
  %v1303 = vpop.xlane.xlu0 %1302
  %v1304 = vsel %vm1291, %v1262, 0.0
  %1305 = vadd.xlane.f32.xlu0 %v1304
  %v1306 = vpop.xlane.xlu0 %1305
  %v1307 = vsel %vm1291, %v1264, 0.0
  %1308 = vadd.xlane.f32.xlu0 %v1307
  %v1309 = vpop.xlane.xlu0 %1308
  %v1310 = vsel %vm1291, %v1267, 0.0
  %1311 = vadd.xlane.f32.xlu0 %v1310
  %v1312 = vpop.xlane.xlu0 %1311
  %v1313 = vsel %vm1291, %v1269, 0.0
  %1314 = vadd.xlane.f32.xlu0 %v1313
  %v1315 = vpop.xlane.xlu0 %1314
  %v1316 = vsel %vm1291, %v1272, 0.0
  %1317 = vadd.xlane.f32.xlu0 %v1316
  %v1318 = vpop.xlane.xlu0 %1317
  %v1319 = vsel %vm1291, %v1274, 0.0
  %1320 = vadd.xlane.f32.xlu0 %v1319
  %v1321 = vpop.xlane.xlu0 %1320
  %v1322 = vsel %vm1291, %v1277, 0.0
  %1323 = vadd.xlane.f32.xlu0 %v1322
  %v1324 = vpop.xlane.xlu0 %1323
  %v1325 = vsel %vm1291, %v1279, 0.0
  %1326 = vadd.xlane.f32.xlu0 %v1325
  %v1327 = vpop.xlane.xlu0 %1326
  %v1328 = vsel %vm1291, %v1282, 0.0
  %1329 = vadd.xlane.f32.xlu0 %v1328
  %v1330 = vpop.xlane.xlu0 %1329
  %v1331 = vsel %vm1291, %v1284, 0.0
  %1332 = vadd.xlane.f32.xlu0 %v1331
  %v1333 = vpop.xlane.xlu0 %1332
  %v1334 = vsel %vm1291, %v1287, 0.0
  %1335 = vadd.xlane.f32.xlu0 %v1334
  %v1336 = vpop.xlane.xlu0 %1335
  %v1337 = vsel %vm1291, %v1289, 0.0
  %1338 = vadd.xlane.f32.xlu0 %v1337
  %v1339 = vpop.xlane.xlu0 %1338
  %v1340 = vmul.f32 %v1252, %v1252
  %v1341 = vmul.f32 %v1254, %v1254
  %v1342 = vmul.f32 %v1257, %v1257
  %v1343 = vmul.f32 %v1259, %v1259
  %v1344 = vmul.f32 %v1262, %v1262
  %v1345 = vmul.f32 %v1264, %v1264
  %v1346 = vmul.f32 %v1267, %v1267
  %v1347 = vmul.f32 %v1269, %v1269
  %v1348 = vmul.f32 %v1272, %v1272
  %v1349 = vmul.f32 %v1274, %v1274
  %v1350 = vmul.f32 %v1277, %v1277
  %v1351 = vmul.f32 %v1279, %v1279
  %v1352 = vmul.f32 %v1282, %v1282
  %v1353 = vmul.f32 %v1284, %v1284
  %v1354 = vmul.f32 %v1287, %v1287
  %v1355 = vmul.f32 %v1289, %v1289
  %v1356 = vsel %vm1291, %v1340, 0.0
  %1357 = vadd.xlane.f32.xlu0 %v1356
  %v1358 = vpop.xlane.xlu0 %1357
  %v1359 = vsel %vm1291, %v1341, 0.0
  %1360 = vadd.xlane.f32.xlu0 %v1359
  %v1361 = vpop.xlane.xlu0 %1360
  %v1362 = vsel %vm1291, %v1342, 0.0
  %1363 = vadd.xlane.f32.xlu0 %v1362
  %v1364 = vpop.xlane.xlu0 %1363
  %v1365 = vsel %vm1291, %v1343, 0.0
  %1366 = vadd.xlane.f32.xlu0 %v1365
  %v1367 = vpop.xlane.xlu0 %1366
  %v1368 = vsel %vm1291, %v1344, 0.0
  %1369 = vadd.xlane.f32.xlu0 %v1368
  %v1370 = vpop.xlane.xlu0 %1369
  %v1371 = vsel %vm1291, %v1345, 0.0
  %1372 = vadd.xlane.f32.xlu0 %v1371
  %v1373 = vpop.xlane.xlu0 %1372
  %v1374 = vsel %vm1291, %v1346, 0.0
  %1375 = vadd.xlane.f32.xlu0 %v1374
  %v1376 = vpop.xlane.xlu0 %1375
  %v1377 = vsel %vm1291, %v1347, 0.0
  %1378 = vadd.xlane.f32.xlu0 %v1377
  %v1379 = vpop.xlane.xlu0 %1378
  %v1380 = vsel %vm1291, %v1348, 0.0
  %1381 = vadd.xlane.f32.xlu0 %v1380
  %v1382 = vpop.xlane.xlu0 %1381
  %v1383 = vsel %vm1291, %v1349, 0.0
  %1384 = vadd.xlane.f32.xlu0 %v1383
  %v1385 = vpop.xlane.xlu0 %1384
  %v1386 = vsel %vm1291, %v1350, 0.0
  %1387 = vadd.xlane.f32.xlu0 %v1386
  %v1388 = vpop.xlane.xlu0 %1387
  %v1389 = vsel %vm1291, %v1351, 0.0
  %1390 = vadd.xlane.f32.xlu0 %v1389
  %v1391 = vpop.xlane.xlu0 %1390
  %v1392 = vsel %vm1291, %v1352, 0.0
  %1393 = vadd.xlane.f32.xlu0 %v1392
  %v1394 = vpop.xlane.xlu0 %1393
  %v1395 = vsel %vm1291, %v1353, 0.0
  %1396 = vadd.xlane.f32.xlu0 %v1395
  %v1397 = vpop.xlane.xlu0 %1396
  %v1398 = vsel %vm1291, %v1354, 0.0
  %1399 = vadd.xlane.f32.xlu0 %v1398
  %v1400 = vpop.xlane.xlu0 %1399
  %v1401 = vsel %vm1291, %v1355, 0.0
  %1402 = vadd.xlane.f32.xlu0 %v1401
  %v1403 = vpop.xlane.xlu0 %1402
  %v1404 = vmul.f32 %v1294, 0.020408163
  %v1405 = vmul.f32 %v1297, 0.020408163
  %v1406 = vmul.f32 %v1300, 0.020408163
  %v1407 = vmul.f32 %v1303, 0.020408163
  %v1408 = vmul.f32 %v1306, 0.020408163
  %v1409 = vmul.f32 %v1309, 0.020408163
  %v1410 = vmul.f32 %v1312, 0.020408163
  %v1411 = vmul.f32 %v1315, 0.020408163
  %v1412 = vmul.f32 %v1318, 0.020408163
  %v1413 = vmul.f32 %v1321, 0.020408163
  %v1414 = vmul.f32 %v1324, 0.020408163
  %v1415 = vmul.f32 %v1327, 0.020408163
  %v1416 = vmul.f32 %v1330, 0.020408163
  %v1417 = vmul.f32 %v1333, 0.020408163
  %v1418 = vmul.f32 %v1336, 0.020408163
  %v1419 = vmul.f32 %v1339, 0.020408163
  %v1420 = vmul.f32 %v1358, 0.020408163
  %v1421 = vmul.f32 %v1361, 0.020408163
  %v1422 = vmul.f32 %v1364, 0.020408163
  %v1423 = vmul.f32 %v1367, 0.020408163
  %v1424 = vmul.f32 %v1370, 0.020408163
  %v1425 = vmul.f32 %v1373, 0.020408163
  %v1426 = vmul.f32 %v1376, 0.020408163
  %v1427 = vmul.f32 %v1379, 0.020408163
  %v1428 = vmul.f32 %v1382, 0.020408163
  %v1429 = vmul.f32 %v1385, 0.020408163
  %v1430 = vmul.f32 %v1388, 0.020408163
  %v1431 = vmul.f32 %v1391, 0.020408163
  %v1432 = vmul.f32 %v1394, 0.020408163
  %v1433 = vmul.f32 %v1397, 0.020408163
  %v1434 = vmul.f32 %v1400, 0.020408163
  %v1435 = vmul.f32 %v1403, 0.020408163
  %v1436 = vmul.f32 %v1404, %v1404
  %v1437 = vmul.f32 %v1405, %v1405
  %v1438 = vmul.f32 %v1406, %v1406
  %v1439 = vmul.f32 %v1407, %v1407
  %v1440 = vmul.f32 %v1408, %v1408
  %v1441 = vmul.f32 %v1409, %v1409
  %v1442 = vmul.f32 %v1410, %v1410
  %v1443 = vmul.f32 %v1411, %v1411
  %v1444 = vmul.f32 %v1412, %v1412
  %v1445 = vmul.f32 %v1413, %v1413
  %v1446 = vmul.f32 %v1414, %v1414
  %v1447 = vmul.f32 %v1415, %v1415
  %v1448 = vmul.f32 %v1416, %v1416
  %v1449 = vmul.f32 %v1417, %v1417
  %v1450 = vmul.f32 %v1418, %v1418
  %v1451 = vmul.f32 %v1419, %v1419
  %v1452 = vsub.f32 %v1420, %v1436
  %v1453 = vsub.f32 %v1421, %v1437
  %v1454 = vsub.f32 %v1422, %v1438
  %v1455 = vsub.f32 %v1423, %v1439
  %v1456 = vsub.f32 %v1424, %v1440
  %v1457 = vsub.f32 %v1425, %v1441
  %v1458 = vsub.f32 %v1426, %v1442
  %v1459 = vsub.f32 %v1427, %v1443
  %v1460 = vsub.f32 %v1428, %v1444
  %v1461 = vsub.f32 %v1429, %v1445
  %v1462 = vsub.f32 %v1430, %v1446
  %v1463 = vsub.f32 %v1431, %v1447
  %v1464 = vsub.f32 %v1432, %v1448
  %v1465 = vsub.f32 %v1433, %v1449
  %v1466 = vsub.f32 %v1434, %v1450
  %v1467 = vsub.f32 %v1435, %v1451
  %v1468 = vmax.f32 %v1452, 0.0
  %v1469 = vmax.f32 %v1453, 0.0
  %v1470 = vmax.f32 %v1454, 0.0
  %v1471 = vmax.f32 %v1455, 0.0
  %v1472 = vmax.f32 %v1456, 0.0
  %v1473 = vmax.f32 %v1457, 0.0
  %v1474 = vmax.f32 %v1458, 0.0
  %v1475 = vmax.f32 %v1459, 0.0
  %v1476 = vmax.f32 %v1460, 0.0
  %v1477 = vmax.f32 %v1461, 0.0
  %v1478 = vmax.f32 %v1462, 0.0
  %v1479 = vmax.f32 %v1463, 0.0
  %v1480 = vmax.f32 %v1464, 0.0
  %v1481 = vmax.f32 %v1465, 0.0
  %v1482 = vmax.f32 %v1466, 0.0
  %v1483 = vmax.f32 %v1467, 0.0
  %v1484 = vadd.f32 %v1468, 1e-05
  %v1485 = vadd.f32 %v1469, 1e-05
  %v1486 = vadd.f32 %v1470, 1e-05
  %v1487 = vadd.f32 %v1471, 1e-05
  %v1488 = vadd.f32 %v1472, 1e-05
  %v1489 = vadd.f32 %v1473, 1e-05
  %v1490 = vadd.f32 %v1474, 1e-05
  %v1491 = vadd.f32 %v1475, 1e-05
  %v1492 = vadd.f32 %v1476, 1e-05
  %v1493 = vadd.f32 %v1477, 1e-05
  %v1494 = vadd.f32 %v1478, 1e-05
  %v1495 = vadd.f32 %v1479, 1e-05
  %v1496 = vadd.f32 %v1480, 1e-05
  %v1497 = vadd.f32 %v1481, 1e-05
  %v1498 = vadd.f32 %v1482, 1e-05
  %v1499 = vadd.f32 %v1483, 1e-05
  %v1500 = vrsqrt.pop %v1484
  %v1501 = vmul.f32 %v1500, %v1484
  %v1502 = vmul.f32 %v1501, %v1500
  %v1503 = vmul.f32 0.5, %v1502
  %v1504 = vsub.f32 1.5, %v1503
  %v1505 = vmul.f32 %v1500, %v1504
  %vm1506 = vweird.f32 %v1484
  %vm1507 = vweird.f32 %v1500
  %vm1508 = vmor %vm1506, %vm1507
  %v1509 = vsel %vm1508, %v1500, %v1505
  %v1510 = vrsqrt.pop %v1485
  %v1511 = vmul.f32 %v1510, %v1485
  %v1512 = vmul.f32 %v1511, %v1510
  %v1513 = vmul.f32 0.5, %v1512
  %v1514 = vsub.f32 1.5, %v1513
  %v1515 = vmul.f32 %v1510, %v1514
  %vm1516 = vweird.f32 %v1485
  %vm1517 = vweird.f32 %v1510
  %vm1518 = vmor %vm1516, %vm1517
  %v1519 = vsel %vm1518, %v1510, %v1515
  %v1520 = vrsqrt.pop %v1486
  %v1521 = vmul.f32 %v1520, %v1486
  %v1522 = vmul.f32 %v1521, %v1520
  %v1523 = vmul.f32 0.5, %v1522
  %v1524 = vsub.f32 1.5, %v1523
  %v1525 = vmul.f32 %v1520, %v1524
  %vm1526 = vweird.f32 %v1486
  %vm1527 = vweird.f32 %v1520
  %vm1528 = vmor %vm1526, %vm1527
  %v1529 = vsel %vm1528, %v1520, %v1525
  %v1530 = vrsqrt.pop %v1487
  %v1531 = vmul.f32 %v1530, %v1487
  %v1532 = vmul.f32 %v1531, %v1530
  %v1533 = vmul.f32 0.5, %v1532
  %v1534 = vsub.f32 1.5, %v1533
  %v1535 = vmul.f32 %v1530, %v1534
  %vm1536 = vweird.f32 %v1487
  %vm1537 = vweird.f32 %v1530
  %vm1538 = vmor %vm1536, %vm1537
  %v1539 = vsel %vm1538, %v1530, %v1535
  %v1540 = vrsqrt.pop %v1488
  %v1541 = vmul.f32 %v1540, %v1488
  %v1542 = vmul.f32 %v1541, %v1540
  %v1543 = vmul.f32 0.5, %v1542
  %v1544 = vsub.f32 1.5, %v1543
  %v1545 = vmul.f32 %v1540, %v1544
  %vm1546 = vweird.f32 %v1488
  %vm1547 = vweird.f32 %v1540
  %vm1548 = vmor %vm1546, %vm1547
  %v1549 = vsel %vm1548, %v1540, %v1545
  %v1550 = vrsqrt.pop %v1489
  %v1551 = vmul.f32 %v1550, %v1489
  %v1552 = vmul.f32 %v1551, %v1550
  %v1553 = vmul.f32 0.5, %v1552
  %v1554 = vsub.f32 1.5, %v1553
  %v1555 = vmul.f32 %v1550, %v1554
  %vm1556 = vweird.f32 %v1489
  %vm1557 = vweird.f32 %v1550
  %vm1558 = vmor %vm1556, %vm1557
  %v1559 = vsel %vm1558, %v1550, %v1555
  %v1560 = vrsqrt.pop %v1490
  %v1561 = vmul.f32 %v1560, %v1490
  %v1562 = vmul.f32 %v1561, %v1560
  %v1563 = vmul.f32 0.5, %v1562
  %v1564 = vsub.f32 1.5, %v1563
  %v1565 = vmul.f32 %v1560, %v1564
  %vm1566 = vweird.f32 %v1490
  %vm1567 = vweird.f32 %v1560
  %vm1568 = vmor %vm1566, %vm1567
  %v1569 = vsel %vm1568, %v1560, %v1565
  %v1570 = vrsqrt.pop %v1491
  %v1571 = vmul.f32 %v1570, %v1491
  %v1572 = vmul.f32 %v1571, %v1570
  %v1573 = vmul.f32 0.5, %v1572
  %v1574 = vsub.f32 1.5, %v1573
  %v1575 = vmul.f32 %v1570, %v1574
  %vm1576 = vweird.f32 %v1491
  %vm1577 = vweird.f32 %v1570
  %vm1578 = vmor %vm1576, %vm1577
  %v1579 = vsel %vm1578, %v1570, %v1575
  %v1580 = vrsqrt.pop %v1492
  %v1581 = vmul.f32 %v1580, %v1492
  %v1582 = vmul.f32 %v1581, %v1580
  %v1583 = vmul.f32 0.5, %v1582
  %v1584 = vsub.f32 1.5, %v1583
  %v1585 = vmul.f32 %v1580, %v1584
  %vm1586 = vweird.f32 %v1492
  %vm1587 = vweird.f32 %v1580
  %vm1588 = vmor %vm1586, %vm1587
  %v1589 = vsel %vm1588, %v1580, %v1585
  %v1590 = vrsqrt.pop %v1493
  %v1591 = vmul.f32 %v1590, %v1493
  %v1592 = vmul.f32 %v1591, %v1590
  %v1593 = vmul.f32 0.5, %v1592
  %v1594 = vsub.f32 1.5, %v1593
  %v1595 = vmul.f32 %v1590, %v1594
  %vm1596 = vweird.f32 %v1493
  %vm1597 = vweird.f32 %v1590
  %vm1598 = vmor %vm1596, %vm1597
  %v1599 = vsel %vm1598, %v1590, %v1595
  %v1600 = vrsqrt.pop %v1494
  %v1601 = vmul.f32 %v1600, %v1494
  %v1602 = vmul.f32 %v1601, %v1600
  %v1603 = vmul.f32 0.5, %v1602
  %v1604 = vsub.f32 1.5, %v1603
  %v1605 = vmul.f32 %v1600, %v1604
  %vm1606 = vweird.f32 %v1494
  %vm1607 = vweird.f32 %v1600
  %vm1608 = vmor %vm1606, %vm1607
  %v1609 = vsel %vm1608, %v1600, %v1605
  %v1610 = vrsqrt.pop %v1495
  %v1611 = vmul.f32 %v1610, %v1495
  %v1612 = vmul.f32 %v1611, %v1610
  %v1613 = vmul.f32 0.5, %v1612
  %v1614 = vsub.f32 1.5, %v1613
  %v1615 = vmul.f32 %v1610, %v1614
  %vm1616 = vweird.f32 %v1495
  %vm1617 = vweird.f32 %v1610
  %vm1618 = vmor %vm1616, %vm1617
  %v1619 = vsel %vm1618, %v1610, %v1615
  %v1620 = vrsqrt.pop %v1496
  %v1621 = vmul.f32 %v1620, %v1496
  %v1622 = vmul.f32 %v1621, %v1620
  %v1623 = vmul.f32 0.5, %v1622
  %v1624 = vsub.f32 1.5, %v1623
  %v1625 = vmul.f32 %v1620, %v1624
  %vm1626 = vweird.f32 %v1496
  %vm1627 = vweird.f32 %v1620
  %vm1628 = vmor %vm1626, %vm1627
  %v1629 = vsel %vm1628, %v1620, %v1625
  %v1630 = vrsqrt.pop %v1497
  %v1631 = vmul.f32 %v1630, %v1497
  %v1632 = vmul.f32 %v1631, %v1630
  %v1633 = vmul.f32 0.5, %v1632
  %v1634 = vsub.f32 1.5, %v1633
  %v1635 = vmul.f32 %v1630, %v1634
  %vm1636 = vweird.f32 %v1497
  %vm1637 = vweird.f32 %v1630
  %vm1638 = vmor %vm1636, %vm1637
  %v1639 = vsel %vm1638, %v1630, %v1635
  %v1640 = vrsqrt.pop %v1498
  %v1641 = vmul.f32 %v1640, %v1498
  %v1642 = vmul.f32 %v1641, %v1640
  %v1643 = vmul.f32 0.5, %v1642
  %v1644 = vsub.f32 1.5, %v1643
  %v1645 = vmul.f32 %v1640, %v1644
  %vm1646 = vweird.f32 %v1498
  %vm1647 = vweird.f32 %v1640
  %vm1648 = vmor %vm1646, %vm1647
  %v1649 = vsel %vm1648, %v1640, %v1645
  %v1650 = vrsqrt.pop %v1499
  %v1651 = vmul.f32 %v1650, %v1499
  %v1652 = vmul.f32 %v1651, %v1650
  %v1653 = vmul.f32 0.5, %v1652
  %v1654 = vsub.f32 1.5, %v1653
  %v1655 = vmul.f32 %v1650, %v1654
  %vm1656 = vweird.f32 %v1499
  %vm1657 = vweird.f32 %v1650
  %vm1658 = vmor %vm1656, %vm1657
  %v1659 = vsel %vm1658, %v1650, %v1655
  %v1660 = vld [vmem:[%s2] sm:$0xff]
  %v1661 = vld [vmem:[%s2 + $0x8] sm:$0xff]
  %v1662 = vld [vmem:[%s2 + $0x10] sm:$0xff]
  %v1663 = vld [vmem:[%s2 + $0x18] sm:$0xff]
  %v1664 = vld [vmem:[%s2 + $0x20] sm:$0xff]
  %v1665 = vld [vmem:[%s2 + $0x28] sm:$0xff]
  %v1666 = vld [vmem:[%s2 + $0x30] sm:$0xff]
  %v1667 = vld [vmem:[%s2 + $0x38] sm:$0xff]
  %v1668 = vld [vmem:[%s2 + $0x40] sm:$0xff]
  %v1669 = vld [vmem:[%s2 + $0x48] sm:$0xff]
  %v1670 = vld [vmem:[%s2 + $0x50] sm:$0xff]
  %v1671 = vld [vmem:[%s2 + $0x58] sm:$0xff]
  %v1672 = vld [vmem:[%s2 + $0x60] sm:$0xff]
  %v1673 = vld [vmem:[%s2 + $0x68] sm:$0xff]
  %v1674 = vld [vmem:[%s2 + $0x70] sm:$0xff]
  %v1675 = vld [vmem:[%s2 + $0x78] sm:$0xff]
  %v1676 = vmul.f32 %v1660, %v1509
  %v1677 = vmul.f32 %v1661, %v1519
  %v1678 = vmul.f32 %v1662, %v1529
  %v1679 = vmul.f32 %v1663, %v1539
  %v1680 = vmul.f32 %v1664, %v1549
  %v1681 = vmul.f32 %v1665, %v1559
  %v1682 = vmul.f32 %v1666, %v1569
  %v1683 = vmul.f32 %v1667, %v1579
  %v1684 = vmul.f32 %v1668, %v1589
  %v1685 = vmul.f32 %v1669, %v1599
  %v1686 = vmul.f32 %v1670, %v1609
  %v1687 = vmul.f32 %v1671, %v1619
  %v1688 = vmul.f32 %v1672, %v1629
  %v1689 = vmul.f32 %v1673, %v1639
  %v1690 = vmul.f32 %v1674, %v1649
  %v1691 = vmul.f32 %v1675, %v1659
  %v1692 = vld [vmem:[%s3] sm:$0xff]
  %v1693 = vld [vmem:[%s3 + $0x8] sm:$0xff]
  %v1694 = vld [vmem:[%s3 + $0x10] sm:$0xff]
  %v1695 = vld [vmem:[%s3 + $0x18] sm:$0xff]
  %v1696 = vld [vmem:[%s3 + $0x20] sm:$0xff]
  %v1697 = vld [vmem:[%s3 + $0x28] sm:$0xff]
  %v1698 = vld [vmem:[%s3 + $0x30] sm:$0xff]
  %v1699 = vld [vmem:[%s3 + $0x38] sm:$0xff]
  %v1700 = vld [vmem:[%s3 + $0x40] sm:$0xff]
  %v1701 = vld [vmem:[%s3 + $0x48] sm:$0xff]
  %v1702 = vld [vmem:[%s3 + $0x50] sm:$0xff]
  %v1703 = vld [vmem:[%s3 + $0x58] sm:$0xff]
  %v1704 = vld [vmem:[%s3 + $0x60] sm:$0xff]
  %v1705 = vld [vmem:[%s3 + $0x68] sm:$0xff]
  %v1706 = vld [vmem:[%s3 + $0x70] sm:$0xff]
  %v1707 = vld [vmem:[%s3 + $0x78] sm:$0xff]
  %v1708 = vmul.f32 %v1404, %v1676
  %v1709 = vmul.f32 %v1405, %v1677
  %v1710 = vmul.f32 %v1406, %v1678
  %v1711 = vmul.f32 %v1407, %v1679
  %v1712 = vmul.f32 %v1408, %v1680
  %v1713 = vmul.f32 %v1409, %v1681
  %v1714 = vmul.f32 %v1410, %v1682
  %v1715 = vmul.f32 %v1411, %v1683
  %v1716 = vmul.f32 %v1412, %v1684
  %v1717 = vmul.f32 %v1413, %v1685
  %v1718 = vmul.f32 %v1414, %v1686
  %v1719 = vmul.f32 %v1415, %v1687
  %v1720 = vmul.f32 %v1416, %v1688
  %v1721 = vmul.f32 %v1417, %v1689
  %v1722 = vmul.f32 %v1418, %v1690
  %v1723 = vmul.f32 %v1419, %v1691
  %v1724 = vsub.f32 %v1692, %v1708
  %v1725 = vsub.f32 %v1693, %v1709
  %v1726 = vsub.f32 %v1694, %v1710
  %v1727 = vsub.f32 %v1695, %v1711
  %v1728 = vsub.f32 %v1696, %v1712
  %v1729 = vsub.f32 %v1697, %v1713
  %v1730 = vsub.f32 %v1698, %v1714
  %v1731 = vsub.f32 %v1699, %v1715
  %v1732 = vsub.f32 %v1700, %v1716
  %v1733 = vsub.f32 %v1701, %v1717
  %v1734 = vsub.f32 %v1702, %v1718
  %v1735 = vsub.f32 %v1703, %v1719
  %v1736 = vsub.f32 %v1704, %v1720
  %v1737 = vsub.f32 %v1705, %v1721
  %v1738 = vsub.f32 %v1706, %v1722
  %v1739 = vsub.f32 %v1707, %v1723
  %1741 = vset.pattern.permute.xlu0 0
  %1742 = vperm.xlu0 %1741, %v1676
  %v1743 = vpop.permute.xlu0 %1742
  %1746 = vset.pattern.permute.xlu0 0
  %1747 = vperm.xlu0 %1746, %v1677
  %v1748 = vpop.permute.xlu0 %1747
  %1751 = vset.pattern.permute.xlu0 0
  %1752 = vperm.xlu0 %1751, %v1678
  %v1753 = vpop.permute.xlu0 %1752
  %1756 = vset.pattern.permute.xlu0 0
  %1757 = vperm.xlu0 %1756, %v1679
  %v1758 = vpop.permute.xlu0 %1757
  %1761 = vset.pattern.permute.xlu0 0
  %1762 = vperm.xlu0 %1761, %v1680
  %v1763 = vpop.permute.xlu0 %1762
  %1766 = vset.pattern.permute.xlu0 0
  %1767 = vperm.xlu0 %1766, %v1681
  %v1768 = vpop.permute.xlu0 %1767
  %1771 = vset.pattern.permute.xlu0 0
  %1772 = vperm.xlu0 %1771, %v1682
  %v1773 = vpop.permute.xlu0 %1772
  %1776 = vset.pattern.permute.xlu0 0
  %1777 = vperm.xlu0 %1776, %v1683
  %v1778 = vpop.permute.xlu0 %1777
  %1781 = vset.pattern.permute.xlu0 0
  %1782 = vperm.xlu0 %1781, %v1684
  %v1783 = vpop.permute.xlu0 %1782
  %1786 = vset.pattern.permute.xlu0 0
  %1787 = vperm.xlu0 %1786, %v1685
  %v1788 = vpop.permute.xlu0 %1787
  %1791 = vset.pattern.permute.xlu0 0
  %1792 = vperm.xlu0 %1791, %v1686
  %v1793 = vpop.permute.xlu0 %1792
  %1796 = vset.pattern.permute.xlu0 0
  %1797 = vperm.xlu0 %1796, %v1687
  %v1798 = vpop.permute.xlu0 %1797
  %1801 = vset.pattern.permute.xlu0 0
  %1802 = vperm.xlu0 %1801, %v1688
  %v1803 = vpop.permute.xlu0 %1802
  %1806 = vset.pattern.permute.xlu0 0
  %1807 = vperm.xlu0 %1806, %v1689
  %v1808 = vpop.permute.xlu0 %1807
  %1811 = vset.pattern.permute.xlu0 0
  %1812 = vperm.xlu0 %1811, %v1690
  %v1813 = vpop.permute.xlu0 %1812
  %1816 = vset.pattern.permute.xlu0 0
  %1817 = vperm.xlu0 %1816, %v1691
  %v1818 = vpop.permute.xlu0 %1817
  %v1820 = vmul.f32 %v1252, %v1743
  %v1821 = vmul.f32 %v1254, %v1748
  %v1822 = vmul.f32 %v1257, %v1753
  %v1823 = vmul.f32 %v1259, %v1758
  %v1824 = vmul.f32 %v1262, %v1763
  %v1825 = vmul.f32 %v1264, %v1768
  %v1826 = vmul.f32 %v1267, %v1773
  %v1827 = vmul.f32 %v1269, %v1778
  %v1828 = vmul.f32 %v1272, %v1783
  %v1829 = vmul.f32 %v1274, %v1788
  %v1830 = vmul.f32 %v1277, %v1793
  %v1831 = vmul.f32 %v1279, %v1798
  %v1832 = vmul.f32 %v1282, %v1803
  %v1833 = vmul.f32 %v1284, %v1808
  %v1834 = vmul.f32 %v1287, %v1813
  %v1835 = vmul.f32 %v1289, %v1818
  %1837 = vset.pattern.permute.xlu0 0
  %1838 = vperm.xlu0 %1837, %v1724
  %v1839 = vpop.permute.xlu0 %1838
  %1842 = vset.pattern.permute.xlu0 0
  %1843 = vperm.xlu0 %1842, %v1725
  %v1844 = vpop.permute.xlu0 %1843
  %1847 = vset.pattern.permute.xlu0 0
  %1848 = vperm.xlu0 %1847, %v1726
  %v1849 = vpop.permute.xlu0 %1848
  %1852 = vset.pattern.permute.xlu0 0
  %1853 = vperm.xlu0 %1852, %v1727
  %v1854 = vpop.permute.xlu0 %1853
  %1857 = vset.pattern.permute.xlu0 0
  %1858 = vperm.xlu0 %1857, %v1728
  %v1859 = vpop.permute.xlu0 %1858
  %1862 = vset.pattern.permute.xlu0 0
  %1863 = vperm.xlu0 %1862, %v1729
  %v1864 = vpop.permute.xlu0 %1863
  %1867 = vset.pattern.permute.xlu0 0
  %1868 = vperm.xlu0 %1867, %v1730
  %v1869 = vpop.permute.xlu0 %1868
  %1872 = vset.pattern.permute.xlu0 0
  %1873 = vperm.xlu0 %1872, %v1731
  %v1874 = vpop.permute.xlu0 %1873
  %1877 = vset.pattern.permute.xlu0 0
  %1878 = vperm.xlu0 %1877, %v1732
  %v1879 = vpop.permute.xlu0 %1878
  %1882 = vset.pattern.permute.xlu0 0
  %1883 = vperm.xlu0 %1882, %v1733
  %v1884 = vpop.permute.xlu0 %1883
  %1887 = vset.pattern.permute.xlu0 0
  %1888 = vperm.xlu0 %1887, %v1734
  %v1889 = vpop.permute.xlu0 %1888
  %1892 = vset.pattern.permute.xlu0 0
  %1893 = vperm.xlu0 %1892, %v1735
  %v1894 = vpop.permute.xlu0 %1893
  %1897 = vset.pattern.permute.xlu0 0
  %1898 = vperm.xlu0 %1897, %v1736
  %v1899 = vpop.permute.xlu0 %1898
  %1902 = vset.pattern.permute.xlu0 0
  %1903 = vperm.xlu0 %1902, %v1737
  %v1904 = vpop.permute.xlu0 %1903
  %1907 = vset.pattern.permute.xlu0 0
  %1908 = vperm.xlu0 %1907, %v1738
  %v1909 = vpop.permute.xlu0 %1908
  %1912 = vset.pattern.permute.xlu0 0
  %1913 = vperm.xlu0 %1912, %v1739
  %v1914 = vpop.permute.xlu0 %1913
  %v1916 = vadd.f32 %v1820, %v1839
  %v1917 = vadd.f32 %v1821, %v1844
  %v1918 = vadd.f32 %v1822, %v1849
  %v1919 = vadd.f32 %v1823, %v1854
  %v1920 = vadd.f32 %v1824, %v1859
  %v1921 = vadd.f32 %v1825, %v1864
  %v1922 = vadd.f32 %v1826, %v1869
  %v1923 = vadd.f32 %v1827, %v1874
  %v1924 = vadd.f32 %v1828, %v1879
  %v1925 = vadd.f32 %v1829, %v1884
  %v1926 = vadd.f32 %v1830, %v1889
  %v1927 = vadd.f32 %v1831, %v1894
  %v1928 = vadd.f32 %v1832, %v1899
  %v1929 = vadd.f32 %v1833, %v1904
  %v1930 = vadd.f32 %v1834, %v1909
  %v1931 = vadd.f32 %v1835, %v1914
  %v1932 = vmax.f32 %v1916, 0.0
  %v1933 = vmax.f32 %v1917, 0.0
  %v1934 = vmax.f32 %v1918, 0.0
  %v1935 = vmax.f32 %v1919, 0.0
  %v1936 = vmax.f32 %v1920, 0.0
  %v1937 = vmax.f32 %v1921, 0.0
  %v1938 = vmax.f32 %v1922, 0.0
  %v1939 = vmax.f32 %v1923, 0.0
  %v1940 = vmax.f32 %v1924, 0.0
  %v1941 = vmax.f32 %v1925, 0.0
  %v1942 = vmax.f32 %v1926, 0.0
  %v1943 = vmax.f32 %v1927, 0.0
  %v1944 = vmax.f32 %v1928, 0.0
  %v1945 = vmax.f32 %v1929, 0.0
  %v1946 = vmax.f32 %v1930, 0.0
  %v1947 = vmax.f32 %v1931, 0.0
  %1948 = vst.msk [vmem:[%s4] sm:$0xff] %vm1291, %v1932
  %1949 = vst.msk [vmem:[%s4 + $0x8] sm:$0xff] %vm1291, %v1933
  %1950 = vst.msk [vmem:[%s4 + $0x10] sm:$0xff] %vm1291, %v1934
  %1951 = vst.msk [vmem:[%s4 + $0x18] sm:$0xff] %vm1291, %v1935
  %1952 = vst.msk [vmem:[%s4 + $0x20] sm:$0xff] %vm1291, %v1936
  %1953 = vst.msk [vmem:[%s4 + $0x28] sm:$0xff] %vm1291, %v1937
  %1954 = vst.msk [vmem:[%s4 + $0x30] sm:$0xff] %vm1291, %v1938
  %1955 = vst.msk [vmem:[%s4 + $0x38] sm:$0xff] %vm1291, %v1939
  %1956 = vst.msk [vmem:[%s4 + $0x40] sm:$0xff] %vm1291, %v1940
  %1957 = vst.msk [vmem:[%s4 + $0x48] sm:$0xff] %vm1291, %v1941
  %1958 = vst.msk [vmem:[%s4 + $0x50] sm:$0xff] %vm1291, %v1942
  %1959 = vst.msk [vmem:[%s4 + $0x58] sm:$0xff] %vm1291, %v1943
  %1960 = vst.msk [vmem:[%s4 + $0x60] sm:$0xff] %vm1291, %v1944
  %1961 = vst.msk [vmem:[%s4 + $0x68] sm:$0xff] %vm1291, %v1945
  %1962 = vst.msk [vmem:[%s4 + $0x70] sm:$0xff] %vm1291, %v1946
  %1963 = vst.msk [vmem:[%s4 + $0x78] sm:$0xff] %vm1291, %v1947
  // Predicated region
  $region18: #{tpu_custom_call.1} parent=0 // pred_check
    _
  $region19: #{tpu_custom_call.1} parent=0 // pred_check_branch
    %1965 = sbr.rel (0) target = $region21
  $region20: #{tpu_custom_call.1} parent=0 // pred_region
    _
  $region21: #{tpu_custom_call.1} parent=0 // pred_fallthru
    _
  // Predicated region
  $region22: #{tpu_custom_call.1} parent=0 // pred_check
    _
  $region23: #{tpu_custom_call.1} parent=0 // pred_check_branch
    %1967 = sbr.rel (0) target = $region25
  $region24: #{tpu_custom_call.1} parent=0 // pred_region
    _
  $region25: #{tpu_custom_call.1} parent=0 // pred_fallthru
    _

</llo_original>
